<compile_context>
chip_gen: v7x
topology: tpu7x:2x2x1
jax: 0.10.0
libtpu: 0.0.40
codegen_flags: <defaults>
</compile_context>

<pallas_src>
import jax
import jax.numpy as jnp
from jax.experimental import pallas as pl
from jax.experimental.pallas import tpu as pltpu


# Original PyTorch dims.
IN_F, H1_F, H2_F, OUT_F = 784, 528, 128, 10
# Lane-aligned (multiple-of-128) padded dims used inside the kernel.
IN_P, H1_P, H2_P, OUT_P = 896, 640, 128, 128


def _round_up(x, m):
    return (x + m - 1) // m * m


def mlp_kernel(x_ref, w1_ref, b1_ref, w2_ref, b2_ref, w3_ref, b3_ref, o_ref):
    # fc1 + ReLU  (bf16 operands, f32 MXU accumulation)
    h1 = jnp.dot(x_ref[...], w1_ref[...], preferred_element_type=jnp.float32)
    h1 = jnp.maximum(h1 + b1_ref[...], 0.0)
    # fc2 + ReLU
    h2 = jnp.dot(h1.astype(jnp.bfloat16), w2_ref[...],
                 preferred_element_type=jnp.float32)
    h2 = jnp.maximum(h2 + b2_ref[...], 0.0)
    # fc3 (padded, lane-dense logits; columns >= 10 are exact zeros)
    out = jnp.dot(h2.astype(jnp.bfloat16), w3_ref[...],
                  preferred_element_type=jnp.float32)
    o_ref[...] = out + b3_ref[...]


def _pad_params(params):
    """Cast weights to bf16 and zero-pad to lane-aligned shapes.

    Weights are stored (in_features, out_features) -- transposed vs. PyTorch --
    so the kernel computes y = x @ W + b.  Zero padding plus ReLU(0)=0 keeps the
    math identical to the unpadded network.
    """
    w1, b1, w2, b2, w3, b3 = params
    w1p = jnp.zeros((IN_P, H1_P), jnp.bfloat16).at[:IN_F, :H1_F].set(w1.astype(jnp.bfloat16))
    b1p = jnp.zeros((1, H1_P), jnp.float32).at[:, :H1_F].set(b1)
    w2p = jnp.zeros((H1_P, H2_P), jnp.bfloat16).at[:H1_F, :H2_F].set(w2.astype(jnp.bfloat16))
    b2p = jnp.zeros((1, H2_P), jnp.float32).at[:, :H2_F].set(b2)
    w3p = jnp.zeros((H2_P, OUT_P), jnp.bfloat16).at[:H2_F, :OUT_F].set(w3.astype(jnp.bfloat16))
    b3p = jnp.zeros((1, OUT_P), jnp.float32).at[:, :OUT_F].set(b3)
    return w1p, b1p, w2p, b2p, w3p, b3p


def net_forward(x, params, *, tm=512):
    """x: (N, 1, 28, 28) float32 -> logits (N, 10) float32."""
    n = x.shape[0]
    x_flat = x.reshape(n, -1)  # (N, 784); flatten is wrapper glue.

    # Batch tile: multiple of 8 sublanes, capped so tiny demos use a single block.
    # tm=512 keeps double-buffered input tiles + ~1.4 MB of resident bf16 weights
    # well under the 32 MiB default scoped-VMEM limit (and v7x's 64 MiB cap).
    tm = min(tm, _round_up(n, 8))
    n_pad = _round_up(n, tm)

    # Pad/cast activations: batch -> n_pad, features 784 -> 896, bf16 for the MXU.
    x_p = jnp.zeros((n_pad, IN_P), jnp.bfloat16)
    x_p = x_p.at[:n, :IN_F].set(x_flat.astype(jnp.bfloat16))

    w1, b1, w2, b2, w3, b3 = _pad_params(params)

    # Weights/biases: same block every grid step -> pinned resident in VMEM.
    def resident(a):
        return pl.BlockSpec(a.shape, lambda i: (0,) * a.ndim)

    out_padded = pl.pallas_call(
        mlp_kernel,
        out_shape=jax.ShapeDtypeStruct((n_pad, OUT_P), jnp.float32),
        grid=(n_pad // tm,),
        in_specs=[
            pl.BlockSpec((tm, IN_P), lambda i: (i, 0)),   # batch-tiled activations
            resident(w1), resident(b1),
            resident(w2), resident(b2),
            resident(w3), resident(b3),
        ],
        out_specs=pl.BlockSpec((tm, OUT_P), lambda i: (i, 0)),  # lane-dense output
        compiler_params=pltpu.CompilerParams(
            dimension_semantics=("parallel",)),               # dual-TC sharding on v7x
    )(x_p, w1, b1, w2, b2, w3, b3)

    return out_padded[:n, :OUT_F]


def init_params(key):
    """Deterministic init mimicking nn.Linear defaults (uniform +/- 1/sqrt(fan_in)).
    Weights are (in, out); biases are (1, out)."""
    sizes = [(IN_F, H1_F), (H1_F, H2_F), (H2_F, OUT_F)]
    params = []
    keys = jax.random.split(key, 2 * len(sizes))
    for i, (fan_in, fan_out) in enumerate(sizes):
        bound = 1.0 / jnp.sqrt(jnp.float32(fan_in))
        w = jax.random.uniform(keys[2 * i], (fan_in, fan_out),
                               minval=-bound, maxval=bound, dtype=jnp.float32)
        b = jax.random.uniform(keys[2 * i + 1], (1, fan_out),
                               minval=-bound, maxval=bound, dtype=jnp.float32)
        params += [w, b]
    return tuple(params)


if __name__ == "__main__":
    key = jax.random.PRNGKey(0)
    k_x, k_p = jax.random.split(key)

    # MNIST-like input: batch=8, NCHW (8, 1, 28, 28) -> flatten(1) gives 784 features.
    x = jax.random.normal(k_x, (8, 1, 28, 28), dtype=jnp.float32)
    params = init_params(k_p)

    logits = net_forward(x, params)
    jax.block_until_ready(logits)

    # Sanity check vs. pure-JAX f32 reference (loose tol: kernel uses bf16 operands).
    w1, b1, w2, b2, w3, b3 = params
    xf = x.reshape(8, -1)
    ref = jnp.maximum(xf @ w1 + b1, 0.0)
    ref = jnp.maximum(ref @ w2 + b2, 0.0)
    ref = ref @ w3 + b3
    assert logits.shape == (8, 10)
    assert jnp.allclose(logits, ref, atol=5e-2, rtol=5e-2)

    print("KERNEL_OK")
</pallas_src>

<mosaic_0001>
module attributes {stable_mosaic.version = 11 : i64} {
  func.func @mlp_kernel(%arg0: i32, %arg1: memref<8x896xbf16, #tpu.memory_space<vmem>>, %arg2: memref<896x640xbf16, #tpu.memory_space<vmem>>, %arg3: memref<1x640xf32, #tpu.memory_space<vmem>>, %arg4: memref<640x128xbf16, #tpu.memory_space<vmem>>, %arg5: memref<1x128xf32, #tpu.memory_space<vmem>>, %arg6: memref<128x128xbf16, #tpu.memory_space<vmem>>, %arg7: memref<1x128xf32, #tpu.memory_space<vmem>>, %arg8: memref<8x128xf32, #tpu.memory_space<vmem>>) attributes {dimension_semantics = [#tpu.dimension_semantics<parallel>], iteration_bounds = array<i64: 1>, scalar_prefetch = 0 : i64, scratch_operands = 0 : i64, tpu.core_type = #tpu.core_type<tc>, window_params = [{transform_indices = @transform_0, window_bounds = array<i64: 8, 896>}, {pipeline_mode = #tpu.pipeline_mode<synchronous>, transform_indices = @transform_1, window_bounds = array<i64: 896, 640>}, {pipeline_mode = #tpu.pipeline_mode<synchronous>, transform_indices = @transform_2, window_bounds = array<i64: 1, 640>}, {pipeline_mode = #tpu.pipeline_mode<synchronous>, transform_indices = @transform_3, window_bounds = array<i64: 640, 128>}, {pipeline_mode = #tpu.pipeline_mode<synchronous>, transform_indices = @transform_4, window_bounds = array<i64: 1, 128>}, {pipeline_mode = #tpu.pipeline_mode<synchronous>, transform_indices = @transform_5, window_bounds = array<i64: 128, 128>}, {pipeline_mode = #tpu.pipeline_mode<synchronous>, transform_indices = @transform_6, window_bounds = array<i64: 1, 128>}, {transform_indices = @transform_7, window_bounds = array<i64: 8, 128>}]} {
    %c0 = arith.constant 0 : index
    %c0_0 = arith.constant 0 : index
    %0 = vector.load %arg1[%c0, %c0_0] : memref<8x896xbf16, #tpu.memory_space<vmem>>, vector<8x896xbf16>
    %c0_1 = arith.constant 0 : index
    %c0_2 = arith.constant 0 : index
    %1 = vector.load %arg2[%c0_1, %c0_2] : memref<896x640xbf16, #tpu.memory_space<vmem>>, vector<896x640xbf16>
    %cst = arith.constant dense<0.000000e+00> : vector<8x640xf32>
    %2 = tpu.matmul %0, %1, %cst {dimension_numbers = #tpu.dot_dimension_numbers<[1], [0], [0], [1], [0, 0, 1, 1], [], []>} : vector<8x896xbf16>, vector<896x640xbf16>, vector<8x640xf32> -> vector<8x640xf32>
    %c0_3 = arith.constant 0 : index
    %c0_4 = arith.constant 0 : index
    %3 = vector.load %arg3[%c0_3, %c0_4] : memref<1x640xf32, #tpu.memory_space<vmem>>, vector<1x640xf32>
    %4 = vector.broadcast %3 : vector<1x640xf32> to vector<8x640xf32>
    %5 = arith.addf %2, %4 : vector<8x640xf32>
    %cst_5 = arith.constant 0.000000e+00 : f32
    %6 = vector.broadcast %cst_5 : f32 to vector<8x640xf32>
    %7 = arith.maximumf %5, %6 : vector<8x640xf32>
    %8 = arith.truncf %7 : vector<8x640xf32> to vector<8x640xbf16>
    %c0_6 = arith.constant 0 : index
    %c0_7 = arith.constant 0 : index
    %9 = vector.load %arg4[%c0_6, %c0_7] : memref<640x128xbf16, #tpu.memory_space<vmem>>, vector<640x128xbf16>
    %cst_8 = arith.constant dense<0.000000e+00> : vector<8x128xf32>
    %10 = tpu.matmul %8, %9, %cst_8 {dimension_numbers = #tpu.dot_dimension_numbers<[1], [0], [0], [1], [0, 0, 1, 1], [], []>} : vector<8x640xbf16>, vector<640x128xbf16>, vector<8x128xf32> -> vector<8x128xf32>
    %c0_9 = arith.constant 0 : index
    %c0_10 = arith.constant 0 : index
    %11 = vector.load %arg5[%c0_9, %c0_10] : memref<1x128xf32, #tpu.memory_space<vmem>>, vector<1x128xf32>
    %12 = vector.broadcast %11 : vector<1x128xf32> to vector<8x128xf32>
    %13 = arith.addf %10, %12 : vector<8x128xf32>
    %cst_11 = arith.constant 0.000000e+00 : f32
    %14 = vector.broadcast %cst_11 : f32 to vector<8x128xf32>
    %15 = arith.maximumf %13, %14 : vector<8x128xf32>
    %16 = arith.truncf %15 : vector<8x128xf32> to vector<8x128xbf16>
    %c0_12 = arith.constant 0 : index
    %c0_13 = arith.constant 0 : index
    %17 = vector.load %arg6[%c0_12, %c0_13] : memref<128x128xbf16, #tpu.memory_space<vmem>>, vector<128x128xbf16>
    %cst_14 = arith.constant dense<0.000000e+00> : vector<8x128xf32>
    %18 = tpu.matmul %16, %17, %cst_14 {dimension_numbers = #tpu.dot_dimension_numbers<[1], [0], [0], [1], [0, 0, 1, 1], [], []>} : vector<8x128xbf16>, vector<128x128xbf16>, vector<8x128xf32> -> vector<8x128xf32>
    %c0_15 = arith.constant 0 : index
    %c0_16 = arith.constant 0 : index
    %19 = vector.load %arg7[%c0_15, %c0_16] : memref<1x128xf32, #tpu.memory_space<vmem>>, vector<1x128xf32>
    %20 = vector.broadcast %19 : vector<1x128xf32> to vector<8x128xf32>
    %21 = arith.addf %18, %20 : vector<8x128xf32>
    %c0_17 = arith.constant 0 : index
    %c0_18 = arith.constant 0 : index
    %22 = vector.load %arg8[%c0_17, %c0_18] : memref<8x128xf32, #tpu.memory_space<vmem>>, vector<8x128xf32>
    tpu.vector_store %arg8[%c0_17, %c0_18], %21 {strides = array<i32>} : memref<8x128xf32, #tpu.memory_space<vmem>>, vector<8x128xf32>,
    return
  }
  func.func @transform_0(%arg0: i32) -> (i32, i32) {
    %c0_i32 = arith.constant 0 : i32
    %c0_i32_0 = arith.constant 0 : i32
    return %arg0, %c0_i32 : i32, i32
  }
  func.func @transform_1(%arg0: i32) -> (i32, i32) {
    %c0_i32 = arith.constant 0 : i32
    %c0_i32_0 = arith.constant 0 : i32
    %c0_i32_1 = arith.constant 0 : i32
    return %c0_i32, %c0_i32_0 : i32, i32
  }
  func.func @transform_2(%arg0: i32) -> (i32, i32) {
    %c0_i32 = arith.constant 0 : i32
    %c0_i32_0 = arith.constant 0 : i32
    %c0_i32_1 = arith.constant 0 : i32
    return %c0_i32, %c0_i32_0 : i32, i32
  }
  func.func @transform_3(%arg0: i32) -> (i32, i32) {
    %c0_i32 = arith.constant 0 : i32
    %c0_i32_0 = arith.constant 0 : i32
    %c0_i32_1 = arith.constant 0 : i32
    return %c0_i32, %c0_i32_0 : i32, i32
  }
  func.func @transform_4(%arg0: i32) -> (i32, i32) {
    %c0_i32 = arith.constant 0 : i32
    %c0_i32_0 = arith.constant 0 : i32
    %c0_i32_1 = arith.constant 0 : i32
    return %c0_i32, %c0_i32_0 : i32, i32
  }
  func.func @transform_5(%arg0: i32) -> (i32, i32) {
    %c0_i32 = arith.constant 0 : i32
    %c0_i32_0 = arith.constant 0 : i32
    %c0_i32_1 = arith.constant 0 : i32
    return %c0_i32, %c0_i32_0 : i32, i32
  }
  func.func @transform_6(%arg0: i32) -> (i32, i32) {
    %c0_i32 = arith.constant 0 : i32
    %c0_i32_0 = arith.constant 0 : i32
    %c0_i32_1 = arith.constant 0 : i32
    return %c0_i32, %c0_i32_0 : i32, i32
  }
  func.func @transform_7(%arg0: i32) -> (i32, i32) {
    %c0_i32 = arith.constant 0 : i32
    %c0_i32_0 = arith.constant 0 : i32
    return %arg0, %c0_i32 : i32, i32
  }
}

</mosaic_0001>

<llo_original>
// kernel: tpu_custom_call.1
$region0: #{tpu_custom_call.1}
  #allocation0 [shape = 'u32[]', space=smem, size = 0x4, offset = 0x4, fixed_abs, tag = 'smem constant byte address 0x4 - core index']
  #allocation1 [shape = 'u32[144,128]{1,0:T(1,128)}', space=vmem, size = 0x12000, scoped, tag = 'internal scratch']
  %s0 = inlined_call_operand.hbm [shape: bf16[8,896], index: 0, kind: input, shape index: {}]
  %s1 = inlined_call_operand.hbm [shape: bf16[896,640], index: 1, kind: input, shape index: {}]
  %s2 = inlined_call_operand.hbm [shape: f32[1,640], index: 2, kind: input, shape index: {}]
  %s3 = inlined_call_operand.hbm [shape: bf16[640,128], index: 3, kind: input, shape index: {}]
  %s4 = inlined_call_operand.hbm [shape: f32[1,128], index: 4, kind: input, shape index: {}]
  %s5 = inlined_call_operand.hbm [shape: bf16[128,128], index: 5, kind: input, shape index: {}]
  %s6 = inlined_call_operand.hbm [shape: f32[1,128], index: 6, kind: input, shape index: {}]
  %s7 = inlined_call_operand.hbm [shape: f32[8,128], index: 7, kind: output, shape index: {}]
  %s8 = sld [smem:[#allocation0]]
  $region66: #{tpu_custom_call.1} parent=0
    _
  %s10 = ssub.s32 1, %s8
  %s11 = scalar_select 0, %s10, %s8
  $region1: #{tpu_custom_call.1} parent=0
    #allocation2 [shape = 'u8[14336]{0}', space=vmem, size = 0x3800, scoped, tag = 'input window, operand 0, single buffered']
    #allocation3 [shape = 's32[1]{0}', space=sflag, size = 0x4, scoped, tag = 'scoped memory for tpu_custom_call.1']
    #allocation4 [shape = 's32[1]{0}', space=sflag, size = 0x4, scoped, tag = 'scoped memory for tpu_custom_call.1']
    #allocation5 [shape = 'u8[1146880]{0}', space=vmem, size = 0x118000, scoped, tag = 'input window, operand 1, single buffered']
    #allocation6 [shape = 's32[1]{0}', space=sflag, size = 0x4, scoped, tag = 'scoped memory for tpu_custom_call.1']
    #allocation7 [shape = 'u8[2560]{0}', space=vmem, size = 0xc00, scoped, tag = 'input window, operand 2, single buffered']
    #allocation8 [shape = 'u8[163840]{0}', space=vmem, size = 0x28000, scoped, tag = 'input window, operand 3, single buffered']
    #allocation9 [shape = 's32[1]{0}', space=sflag, size = 0x4, scoped, tag = 'scoped memory for tpu_custom_call.1']
    #allocation10 [shape = 'u8[512]{0}', space=vmem, size = 0x400, scoped, tag = 'input window, operand 4, single buffered']
    #allocation11 [shape = 'u8[32768]{0}', space=vmem, size = 0x8000, scoped, tag = 'input window, operand 5, single buffered']
    #allocation12 [shape = 's32[1]{0}', space=sflag, size = 0x4, scoped, tag = 'scoped memory for tpu_custom_call.1']
    #allocation13 [shape = 'u8[512]{0}', space=vmem, size = 0x400, scoped, tag = 'input window, operand 6, single buffered']
    #allocation14 [shape = 'u8[4096]{0}', space=vmem, size = 0x1000, scoped, tag = 'output window, operand 0, single buffered']
    %12 = vsyncpa [#allocation3], 0
    %13 = vsyncpa [#allocation6], 0
    %14 = vsyncpa [#allocation9], 0
    %15 = vsyncpa [#allocation12], 0
    %16 = vsyncpa [#allocation4], 0
    // Predicated region
    $region2: #{tpu_custom_call.1} parent=1 // pred_check
      _
    $region3: #{tpu_custom_call.1} parent=1 // pred_check_branch
      %18 = sbr.rel (0) target = $region5
    $region4: #{tpu_custom_call.1} parent=1 // pred_region
      %s20 = ssub.s32 448, 448
      %21 = vsyncadd [#allocation3], %s20
      %s23 = sshll.u32 [#allocation2], 4
      %s24 = int_to_ptr.vmem [resolvable:$true] %s23
      %26 = dma.hbm_to_vmem [thread:$0]  %s0, 448, %s24, [#allocation3]
    $region5: #{tpu_custom_call.1} parent=1 // pred_fallthru
      _
    // Predicated region
    $region6: #{tpu_custom_call.1} parent=1 // pred_check
      _
    $region7: #{tpu_custom_call.1} parent=1 // pred_check_branch
      %28 = sbr.rel (0) target = $region9
    $region8: #{tpu_custom_call.1} parent=1 // pred_region
      %s30 = ssub.s32 35840, 35840
      %31 = vsyncadd [#allocation6], %s30
      %s32 = sshll.u32 [#allocation5], 4
      %s33 = int_to_ptr.vmem [resolvable:$true] %s32
      %38 = dma.hbm_to_vmem [thread:$0]  %s1, 35840, %s33, [#allocation6], 320, 320, 20
    $region9: #{tpu_custom_call.1} parent=1 // pred_fallthru
      _
    // Predicated region
    $region10: #{tpu_custom_call.1} parent=1 // pred_check
      _
    $region11: #{tpu_custom_call.1} parent=1 // pred_check_branch
      %40 = sbr.rel (0) target = $region13
    $region12: #{tpu_custom_call.1} parent=1 // pred_region
      %s42 = ssub.s32 80, 80
      %43 = vsyncadd [#allocation6], %s42
      %s45 = sshll.u32 [#allocation7], 4
      %s46 = int_to_ptr.vmem [resolvable:$true] %s45
      %48 = dma.hbm_to_vmem [thread:$0]  %s2, 80, %s46, [#allocation6]
    $region13: #{tpu_custom_call.1} parent=1 // pred_fallthru
      _
    // Predicated region
    $region14: #{tpu_custom_call.1} parent=1 // pred_check
      _
    $region15: #{tpu_custom_call.1} parent=1 // pred_check_branch
      %50 = sbr.rel (0) target = $region17
    $region16: #{tpu_custom_call.1} parent=1 // pred_region
      %s52 = ssub.s32 5120, 5120
      %53 = vsyncadd [#allocation9], %s52
      %s54 = sshll.u32 [#allocation8], 4
      %s55 = int_to_ptr.vmem [resolvable:$true] %s54
      %60 = dma.hbm_to_vmem [thread:$0]  %s3, 5120, %s55, [#allocation9], 64, 64, 4
    $region17: #{tpu_custom_call.1} parent=1 // pred_fallthru
      _
    // Predicated region
    $region18: #{tpu_custom_call.1} parent=1 // pred_check
      _
    $region19: #{tpu_custom_call.1} parent=1 // pred_check_branch
      %62 = sbr.rel (0) target = $region21
    $region20: #{tpu_custom_call.1} parent=1 // pred_region
      %s64 = ssub.s32 16, 16
      %65 = vsyncadd [#allocation9], %s64
      %s67 = sshll.u32 [#allocation10], 4
      %s68 = int_to_ptr.vmem [resolvable:$true] %s67
      %70 = dma.hbm_to_vmem [thread:$0]  %s4, 16, %s68, [#allocation9]
    $region21: #{tpu_custom_call.1} parent=1 // pred_fallthru
      _
    // Predicated region
    $region22: #{tpu_custom_call.1} parent=1 // pred_check
      _
    $region23: #{tpu_custom_call.1} parent=1 // pred_check_branch
      %72 = sbr.rel (0) target = $region25
    $region24: #{tpu_custom_call.1} parent=1 // pred_region
      %s74 = ssub.s32 1024, 1024
      %75 = vsyncadd [#allocation12], %s74
      %s76 = sshll.u32 [#allocation11], 4
      %s77 = int_to_ptr.vmem [resolvable:$true] %s76
      %82 = dma.hbm_to_vmem [thread:$0]  %s5, 1024, %s77, [#allocation12], 64, 64, 4
    $region25: #{tpu_custom_call.1} parent=1 // pred_fallthru
      _
    // Predicated region
    $region26: #{tpu_custom_call.1} parent=1 // pred_check
      _
    $region27: #{tpu_custom_call.1} parent=1 // pred_check_branch
      %84 = sbr.rel (0) target = $region29
    $region28: #{tpu_custom_call.1} parent=1 // pred_region
      %s86 = ssub.s32 16, 16
      %87 = vsyncadd [#allocation12], %s86
      %s89 = sshll.u32 [#allocation13], 4
      %s90 = int_to_ptr.vmem [resolvable:$true] %s89
      %92 = dma.hbm_to_vmem [thread:$0]  %s6, 16, %s90, [#allocation12]
    $region29: #{tpu_custom_call.1} parent=1 // pred_fallthru
      _
    // Predicated region
    $region30: #{tpu_custom_call.1} parent=1 // pred_check
      _
    $region31: #{tpu_custom_call.1} parent=1 // pred_check_branch
      %94 = sbr.rel (0) target = $region33
    $region32: #{tpu_custom_call.1} parent=1 // pred_region
      %95 = dma.done [#allocation3], 448
    $region33: #{tpu_custom_call.1} parent=1 // pred_fallthru
      _
    // Predicated region
    $region34: #{tpu_custom_call.1} parent=1 // pred_check
      _
    $region35: #{tpu_custom_call.1} parent=1 // pred_check_branch
      %97 = sbr.rel (0) target = $region37
    $region36: #{tpu_custom_call.1} parent=1 // pred_region
      %98 = dma.done [#allocation6], 35840
    $region37: #{tpu_custom_call.1} parent=1 // pred_fallthru
      _
    // Predicated region
    $region38: #{tpu_custom_call.1} parent=1 // pred_check
      _
    $region39: #{tpu_custom_call.1} parent=1 // pred_check_branch
      %100 = sbr.rel (0) target = $region41
    $region40: #{tpu_custom_call.1} parent=1 // pred_region
      %101 = dma.done [#allocation6], 80
    $region41: #{tpu_custom_call.1} parent=1 // pred_fallthru
      _
    // Predicated region
    $region42: #{tpu_custom_call.1} parent=1 // pred_check
      _
    $region43: #{tpu_custom_call.1} parent=1 // pred_check_branch
      %103 = sbr.rel (0) target = $region45
    $region44: #{tpu_custom_call.1} parent=1 // pred_region
      %104 = dma.done [#allocation9], 5120
    $region45: #{tpu_custom_call.1} parent=1 // pred_fallthru
      _
    // Predicated region
    $region46: #{tpu_custom_call.1} parent=1 // pred_check
      _
    $region47: #{tpu_custom_call.1} parent=1 // pred_check_branch
      %106 = sbr.rel (0) target = $region49
    $region48: #{tpu_custom_call.1} parent=1 // pred_region
      %107 = dma.done [#allocation9], 16
    $region49: #{tpu_custom_call.1} parent=1 // pred_fallthru
      _
    // Predicated region
    $region50: #{tpu_custom_call.1} parent=1 // pred_check
      _
    $region51: #{tpu_custom_call.1} parent=1 // pred_check_branch
      %109 = sbr.rel (0) target = $region53
    $region52: #{tpu_custom_call.1} parent=1 // pred_region
      %110 = dma.done [#allocation12], 1024
    $region53: #{tpu_custom_call.1} parent=1 // pred_fallthru
      _
    // Predicated region
    $region54: #{tpu_custom_call.1} parent=1 // pred_check
      _
    $region55: #{tpu_custom_call.1} parent=1 // pred_check_branch
      %112 = sbr.rel (0) target = $region57
    $region56: #{tpu_custom_call.1} parent=1 // pred_region
      %113 = dma.done [#allocation12], 16
    $region57: #{tpu_custom_call.1} parent=1 // pred_fallthru
      _
    %v115 = vld [vmem:[#allocation2] sm:$0xff]
    %v116 = vld [vmem:[#allocation2 + $0x8] sm:$0xff]
    %v117 = vld [vmem:[#allocation2 + $0x10] sm:$0xff]
    %v118 = vld [vmem:[#allocation2 + $0x18] sm:$0xf]
    %v119 = vld [vmem:[#allocation5] sm:$0xff]
    %v120 = vld [vmem:[#allocation5 + $0x8] sm:$0xff]
    %v121 = vld [vmem:[#allocation5 + $0x10] sm:$0xf]
    %v122 = vld [vmem:[#allocation5 + $0x14] sm:$0xff]
    %v123 = vld [vmem:[#allocation5 + $0x1c] sm:$0xff]
    %v124 = vld [vmem:[#allocation5 + $0x24] sm:$0xf]
    %v125 = vld [vmem:[#allocation5 + $0x28] sm:$0xff]
    %v126 = vld [vmem:[#allocation5 + $0x30] sm:$0xff]
    %v127 = vld [vmem:[#allocation5 + $0x38] sm:$0xf]
    %v128 = vld [vmem:[#allocation5 + $0x3c] sm:$0xff]
    %v129 = vld [vmem:[#allocation5 + $0x44] sm:$0xff]
    %v130 = vld [vmem:[#allocation5 + $0x4c] sm:$0xf]
    %v131 = vld [vmem:[#allocation5 + $0x50] sm:$0xff]
    %v132 = vld [vmem:[#allocation5 + $0x58] sm:$0xff]
    %v133 = vld [vmem:[#allocation5 + $0x60] sm:$0xf]
    %v134 = vld [vmem:[#allocation5 + $0x64] sm:$0xff]
    %v135 = vld [vmem:[#allocation5 + $0x6c] sm:$0xff]
    %v136 = vld [vmem:[#allocation5 + $0x74] sm:$0xf]
    %v137 = vld [vmem:[#allocation5 + $0x78] sm:$0xff]
    %v138 = vld [vmem:[#allocation5 + $0x80] sm:$0xff]
    %v139 = vld [vmem:[#allocation5 + $0x88] sm:$0xf]
    %v140 = vld [vmem:[#allocation5 + $0x8c] sm:$0xff]
    %v141 = vld [vmem:[#allocation5 + $0x94] sm:$0xff]
    %v142 = vld [vmem:[#allocation5 + $0x9c] sm:$0xf]
    %v143 = vld [vmem:[#allocation5 + $0xa0] sm:$0xff]
    %v144 = vld [vmem:[#allocation5 + $0xa8] sm:$0xff]
    %v145 = vld [vmem:[#allocation5 + $0xb0] sm:$0xf]
    %v146 = vld [vmem:[#allocation5 + $0xb4] sm:$0xff]
    %v147 = vld [vmem:[#allocation5 + $0xbc] sm:$0xff]
    %v148 = vld [vmem:[#allocation5 + $0xc4] sm:$0xf]
    %v149 = vld [vmem:[#allocation5 + $0xc8] sm:$0xff]
    %v150 = vld [vmem:[#allocation5 + $0xd0] sm:$0xff]
    %v151 = vld [vmem:[#allocation5 + $0xd8] sm:$0xf]
    %v152 = vld [vmem:[#allocation5 + $0xdc] sm:$0xff]
    %v153 = vld [vmem:[#allocation5 + $0xe4] sm:$0xff]
    %v154 = vld [vmem:[#allocation5 + $0xec] sm:$0xf]
    %v155 = vld [vmem:[#allocation5 + $0xf0] sm:$0xff]
    %v156 = vld [vmem:[#allocation5 + $0xf8] sm:$0xff]
    %v157 = vld [vmem:[#allocation5 + $0x100] sm:$0xf]
    %v158 = vld [vmem:[#allocation5 + $0x104] sm:$0xff]
    %v159 = vld [vmem:[#allocation5 + $0x10c] sm:$0xff]
    %v160 = vld [vmem:[#allocation5 + $0x114] sm:$0xf]
    %v161 = vld [vmem:[#allocation5 + $0x118] sm:$0xff]
    %v162 = vld [vmem:[#allocation5 + $0x120] sm:$0xff]
    %v163 = vld [vmem:[#allocation5 + $0x128] sm:$0xf]
    %v164 = vld [vmem:[#allocation5 + $0x12c] sm:$0xff]
    %v165 = vld [vmem:[#allocation5 + $0x134] sm:$0xff]
    %v166 = vld [vmem:[#allocation5 + $0x13c] sm:$0xf]
    %v167 = vld [vmem:[#allocation5 + $0x140] sm:$0xff]
    %v168 = vld [vmem:[#allocation5 + $0x148] sm:$0xff]
    %v169 = vld [vmem:[#allocation5 + $0x150] sm:$0xf]
    %v170 = vld [vmem:[#allocation5 + $0x154] sm:$0xff]
    %v171 = vld [vmem:[#allocation5 + $0x15c] sm:$0xff]
    %v172 = vld [vmem:[#allocation5 + $0x164] sm:$0xf]
    %v173 = vld [vmem:[#allocation5 + $0x168] sm:$0xff]
    %v174 = vld [vmem:[#allocation5 + $0x170] sm:$0xff]
    %v175 = vld [vmem:[#allocation5 + $0x178] sm:$0xf]
    %v176 = vld [vmem:[#allocation5 + $0x17c] sm:$0xff]
    %v177 = vld [vmem:[#allocation5 + $0x184] sm:$0xff]
    %v178 = vld [vmem:[#allocation5 + $0x18c] sm:$0xf]
    %v179 = vld [vmem:[#allocation5 + $0x190] sm:$0xff]
    %v180 = vld [vmem:[#allocation5 + $0x198] sm:$0xff]
    %v181 = vld [vmem:[#allocation5 + $0x1a0] sm:$0xf]
    %v182 = vld [vmem:[#allocation5 + $0x1a4] sm:$0xff]
    %v183 = vld [vmem:[#allocation5 + $0x1ac] sm:$0xff]
    %v184 = vld [vmem:[#allocation5 + $0x1b4] sm:$0xf]
    %v185 = vld [vmem:[#allocation5 + $0x1b8] sm:$0xff]
    %v186 = vld [vmem:[#allocation5 + $0x1c0] sm:$0xff]
    %v187 = vld [vmem:[#allocation5 + $0x1c8] sm:$0xf]
    %v188 = vld [vmem:[#allocation5 + $0x1cc] sm:$0xff]
    %v189 = vld [vmem:[#allocation5 + $0x1d4] sm:$0xff]
    %v190 = vld [vmem:[#allocation5 + $0x1dc] sm:$0xf]
    %v191 = vld [vmem:[#allocation5 + $0x1e0] sm:$0xff]
    %v192 = vld [vmem:[#allocation5 + $0x1e8] sm:$0xff]
    %v193 = vld [vmem:[#allocation5 + $0x1f0] sm:$0xf]
    %v194 = vld [vmem:[#allocation5 + $0x1f4] sm:$0xff]
    %v195 = vld [vmem:[#allocation5 + $0x1fc] sm:$0xff]
    %v196 = vld [vmem:[#allocation5 + $0x204] sm:$0xf]
    %v197 = vld [vmem:[#allocation5 + $0x208] sm:$0xff]
    %v198 = vld [vmem:[#allocation5 + $0x210] sm:$0xff]
    %v199 = vld [vmem:[#allocation5 + $0x218] sm:$0xf]
    %v200 = vld [vmem:[#allocation5 + $0x21c] sm:$0xff]
    %v201 = vld [vmem:[#allocation5 + $0x224] sm:$0xff]
    %v202 = vld [vmem:[#allocation5 + $0x22c] sm:$0xf]
    %v203 = vld [vmem:[#allocation5 + $0x230] sm:$0xff]
    %v204 = vld [vmem:[#allocation5 + $0x238] sm:$0xff]
    %v205 = vld [vmem:[#allocation5 + $0x240] sm:$0xf]
    %v206 = vld [vmem:[#allocation5 + $0x244] sm:$0xff]
    %v207 = vld [vmem:[#allocation5 + $0x24c] sm:$0xff]
    %v208 = vld [vmem:[#allocation5 + $0x254] sm:$0xf]
    %v209 = vld [vmem:[#allocation5 + $0x258] sm:$0xff]
    %v210 = vld [vmem:[#allocation5 + $0x260] sm:$0xff]
    %v211 = vld [vmem:[#allocation5 + $0x268] sm:$0xf]
    %v212 = vld [vmem:[#allocation5 + $0x26c] sm:$0xff]
    %v213 = vld [vmem:[#allocation5 + $0x274] sm:$0xff]
    %v214 = vld [vmem:[#allocation5 + $0x27c] sm:$0xf]
    %v215 = vld [vmem:[#allocation5 + $0x280] sm:$0xff]
    %v216 = vld [vmem:[#allocation5 + $0x288] sm:$0xff]
    %v217 = vld [vmem:[#allocation5 + $0x290] sm:$0xf]
    %v218 = vld [vmem:[#allocation5 + $0x294] sm:$0xff]
    %v219 = vld [vmem:[#allocation5 + $0x29c] sm:$0xff]
    %v220 = vld [vmem:[#allocation5 + $0x2a4] sm:$0xf]
    %v221 = vld [vmem:[#allocation5 + $0x2a8] sm:$0xff]
    %v222 = vld [vmem:[#allocation5 + $0x2b0] sm:$0xff]
    %v223 = vld [vmem:[#allocation5 + $0x2b8] sm:$0xf]
    %v224 = vld [vmem:[#allocation5 + $0x2bc] sm:$0xff]
    %v225 = vld [vmem:[#allocation5 + $0x2c4] sm:$0xff]
    %v226 = vld [vmem:[#allocation5 + $0x2cc] sm:$0xf]
    %v227 = vld [vmem:[#allocation5 + $0x2d0] sm:$0xff]
    %v228 = vld [vmem:[#allocation5 + $0x2d8] sm:$0xff]
    %v229 = vld [vmem:[#allocation5 + $0x2e0] sm:$0xf]
    %v230 = vld [vmem:[#allocation5 + $0x2e4] sm:$0xff]
    %v231 = vld [vmem:[#allocation5 + $0x2ec] sm:$0xff]
    %v232 = vld [vmem:[#allocation5 + $0x2f4] sm:$0xf]
    %v233 = vld [vmem:[#allocation5 + $0x2f8] sm:$0xff]
    %v234 = vld [vmem:[#allocation5 + $0x300] sm:$0xff]
    %v235 = vld [vmem:[#allocation5 + $0x308] sm:$0xf]
    %v236 = vld [vmem:[#allocation5 + $0x30c] sm:$0xff]
    %v237 = vld [vmem:[#allocation5 + $0x314] sm:$0xff]
    %v238 = vld [vmem:[#allocation5 + $0x31c] sm:$0xf]
    %v239 = vld [vmem:[#allocation5 + $0x320] sm:$0xff]
    %v240 = vld [vmem:[#allocation5 + $0x328] sm:$0xff]
    %v241 = vld [vmem:[#allocation5 + $0x330] sm:$0xf]
    %v242 = vld [vmem:[#allocation5 + $0x334] sm:$0xff]
    %v243 = vld [vmem:[#allocation5 + $0x33c] sm:$0xff]
    %v244 = vld [vmem:[#allocation5 + $0x344] sm:$0xf]
    %v245 = vld [vmem:[#allocation5 + $0x348] sm:$0xff]
    %v246 = vld [vmem:[#allocation5 + $0x350] sm:$0xff]
    %v247 = vld [vmem:[#allocation5 + $0x358] sm:$0xf]
    %v248 = vld [vmem:[#allocation5 + $0x35c] sm:$0xff]
    %v249 = vld [vmem:[#allocation5 + $0x364] sm:$0xff]
    %v250 = vld [vmem:[#allocation5 + $0x36c] sm:$0xf]
    %v251 = vld [vmem:[#allocation5 + $0x370] sm:$0xff]
    %v252 = vld [vmem:[#allocation5 + $0x378] sm:$0xff]
    %v253 = vld [vmem:[#allocation5 + $0x380] sm:$0xf]
    %v254 = vld [vmem:[#allocation5 + $0x384] sm:$0xff]
    %v255 = vld [vmem:[#allocation5 + $0x38c] sm:$0xff]
    %v256 = vld [vmem:[#allocation5 + $0x394] sm:$0xf]
    %v257 = vld [vmem:[#allocation5 + $0x398] sm:$0xff]
    %v258 = vld [vmem:[#allocation5 + $0x3a0] sm:$0xff]
    %v259 = vld [vmem:[#allocation5 + $0x3a8] sm:$0xf]
    %v260 = vld [vmem:[#allocation5 + $0x3ac] sm:$0xff]
    %v261 = vld [vmem:[#allocation5 + $0x3b4] sm:$0xff]
    %v262 = vld [vmem:[#allocation5 + $0x3bc] sm:$0xf]
    %v263 = vld [vmem:[#allocation5 + $0x3c0] sm:$0xff]
    %v264 = vld [vmem:[#allocation5 + $0x3c8] sm:$0xff]
    %v265 = vld [vmem:[#allocation5 + $0x3d0] sm:$0xf]
    %v266 = vld [vmem:[#allocation5 + $0x3d4] sm:$0xff]
    %v267 = vld [vmem:[#allocation5 + $0x3dc] sm:$0xff]
    %v268 = vld [vmem:[#allocation5 + $0x3e4] sm:$0xf]
    %v269 = vld [vmem:[#allocation5 + $0x3e8] sm:$0xff]
    %v270 = vld [vmem:[#allocation5 + $0x3f0] sm:$0xff]
    %v271 = vld [vmem:[#allocation5 + $0x3f8] sm:$0xf]
    %v272 = vld [vmem:[#allocation5 + $0x3fc] sm:$0xff]
    %v273 = vld [vmem:[#allocation5 + $0x404] sm:$0xff]
    %v274 = vld [vmem:[#allocation5 + $0x40c] sm:$0xf]
    %v275 = vld [vmem:[#allocation5 + $0x410] sm:$0xff]
    %v276 = vld [vmem:[#allocation5 + $0x418] sm:$0xff]
    %v277 = vld [vmem:[#allocation5 + $0x420] sm:$0xf]
    %v278 = vld [vmem:[#allocation5 + $0x424] sm:$0xff]
    %v279 = vld [vmem:[#allocation5 + $0x42c] sm:$0xff]
    %v280 = vld [vmem:[#allocation5 + $0x434] sm:$0xf]
    %v281 = vld [vmem:[#allocation5 + $0x438] sm:$0xff]
    %v282 = vld [vmem:[#allocation5 + $0x440] sm:$0xff]
    %v283 = vld [vmem:[#allocation5 + $0x448] sm:$0xf]
    %v284 = vld [vmem:[#allocation5 + $0x44c] sm:$0xff]
    %v285 = vld [vmem:[#allocation5 + $0x454] sm:$0xff]
    %v286 = vld [vmem:[#allocation5 + $0x45c] sm:$0xf]
    %v287 = vld [vmem:[#allocation5 + $0x460] sm:$0xff]
    %v288 = vld [vmem:[#allocation5 + $0x468] sm:$0xff]
    %v289 = vld [vmem:[#allocation5 + $0x470] sm:$0xf]
    %v290 = vld [vmem:[#allocation5 + $0x474] sm:$0xff]
    %v291 = vld [vmem:[#allocation5 + $0x47c] sm:$0xff]
    %v292 = vld [vmem:[#allocation5 + $0x484] sm:$0xf]
    %v293 = vld [vmem:[#allocation5 + $0x488] sm:$0xff]
    %v294 = vld [vmem:[#allocation5 + $0x490] sm:$0xff]
    %v295 = vld [vmem:[#allocation5 + $0x498] sm:$0xf]
    %v296 = vld [vmem:[#allocation5 + $0x49c] sm:$0xff]
    %v297 = vld [vmem:[#allocation5 + $0x4a4] sm:$0xff]
    %v298 = vld [vmem:[#allocation5 + $0x4ac] sm:$0xf]
    %v299 = vld [vmem:[#allocation5 + $0x4b0] sm:$0xff]
    %v300 = vld [vmem:[#allocation5 + $0x4b8] sm:$0xff]
    %v301 = vld [vmem:[#allocation5 + $0x4c0] sm:$0xf]
    %v302 = vld [vmem:[#allocation5 + $0x4c4] sm:$0xff]
    %v303 = vld [vmem:[#allocation5 + $0x4cc] sm:$0xff]
    %v304 = vld [vmem:[#allocation5 + $0x4d4] sm:$0xf]
    %v305 = vld [vmem:[#allocation5 + $0x4d8] sm:$0xff]
    %v306 = vld [vmem:[#allocation5 + $0x4e0] sm:$0xff]
    %v307 = vld [vmem:[#allocation5 + $0x4e8] sm:$0xf]
    %v308 = vld [vmem:[#allocation5 + $0x4ec] sm:$0xff]
    %v309 = vld [vmem:[#allocation5 + $0x4f4] sm:$0xff]
    %v310 = vld [vmem:[#allocation5 + $0x4fc] sm:$0xf]
    %v311 = vld [vmem:[#allocation5 + $0x500] sm:$0xff]
    %v312 = vld [vmem:[#allocation5 + $0x508] sm:$0xff]
    %v313 = vld [vmem:[#allocation5 + $0x510] sm:$0xf]
    %v314 = vld [vmem:[#allocation5 + $0x514] sm:$0xff]
    %v315 = vld [vmem:[#allocation5 + $0x51c] sm:$0xff]
    %v316 = vld [vmem:[#allocation5 + $0x524] sm:$0xf]
    %v317 = vld [vmem:[#allocation5 + $0x528] sm:$0xff]
    %v318 = vld [vmem:[#allocation5 + $0x530] sm:$0xff]
    %v319 = vld [vmem:[#allocation5 + $0x538] sm:$0xf]
    %v320 = vld [vmem:[#allocation5 + $0x53c] sm:$0xff]
    %v321 = vld [vmem:[#allocation5 + $0x544] sm:$0xff]
    %v322 = vld [vmem:[#allocation5 + $0x54c] sm:$0xf]
    %v323 = vld [vmem:[#allocation5 + $0x550] sm:$0xff]
    %v324 = vld [vmem:[#allocation5 + $0x558] sm:$0xff]
    %v325 = vld [vmem:[#allocation5 + $0x560] sm:$0xf]
    %v326 = vld [vmem:[#allocation5 + $0x564] sm:$0xff]
    %v327 = vld [vmem:[#allocation5 + $0x56c] sm:$0xff]
    %v328 = vld [vmem:[#allocation5 + $0x574] sm:$0xf]
    %v329 = vld [vmem:[#allocation5 + $0x578] sm:$0xff]
    %v330 = vld [vmem:[#allocation5 + $0x580] sm:$0xff]
    %v331 = vld [vmem:[#allocation5 + $0x588] sm:$0xf]
    %v332 = vld [vmem:[#allocation5 + $0x58c] sm:$0xff]
    %v333 = vld [vmem:[#allocation5 + $0x594] sm:$0xff]
    %v334 = vld [vmem:[#allocation5 + $0x59c] sm:$0xf]
    %v335 = vld [vmem:[#allocation5 + $0x5a0] sm:$0xff]
    %v336 = vld [vmem:[#allocation5 + $0x5a8] sm:$0xff]
    %v337 = vld [vmem:[#allocation5 + $0x5b0] sm:$0xf]
    %v338 = vld [vmem:[#allocation5 + $0x5b4] sm:$0xff]
    %v339 = vld [vmem:[#allocation5 + $0x5bc] sm:$0xff]
    %v340 = vld [vmem:[#allocation5 + $0x5c4] sm:$0xf]
    %v341 = vld [vmem:[#allocation5 + $0x5c8] sm:$0xff]
    %v342 = vld [vmem:[#allocation5 + $0x5d0] sm:$0xff]
    %v343 = vld [vmem:[#allocation5 + $0x5d8] sm:$0xf]
    %v344 = vld [vmem:[#allocation5 + $0x5dc] sm:$0xff]
    %v345 = vld [vmem:[#allocation5 + $0x5e4] sm:$0xff]
    %v346 = vld [vmem:[#allocation5 + $0x5ec] sm:$0xf]
    %v347 = vld [vmem:[#allocation5 + $0x5f0] sm:$0xff]
    %v348 = vld [vmem:[#allocation5 + $0x5f8] sm:$0xff]
    %v349 = vld [vmem:[#allocation5 + $0x600] sm:$0xf]
    %v350 = vld [vmem:[#allocation5 + $0x604] sm:$0xff]
    %v351 = vld [vmem:[#allocation5 + $0x60c] sm:$0xff]
    %v352 = vld [vmem:[#allocation5 + $0x614] sm:$0xf]
    %v353 = vld [vmem:[#allocation5 + $0x618] sm:$0xff]
    %v354 = vld [vmem:[#allocation5 + $0x620] sm:$0xff]
    %v355 = vld [vmem:[#allocation5 + $0x628] sm:$0xf]
    %v356 = vld [vmem:[#allocation5 + $0x62c] sm:$0xff]
    %v357 = vld [vmem:[#allocation5 + $0x634] sm:$0xff]
    %v358 = vld [vmem:[#allocation5 + $0x63c] sm:$0xf]
    %v359 = vld [vmem:[#allocation5 + $0x640] sm:$0xff]
    %v360 = vld [vmem:[#allocation5 + $0x648] sm:$0xff]
    %v361 = vld [vmem:[#allocation5 + $0x650] sm:$0xf]
    %v362 = vld [vmem:[#allocation5 + $0x654] sm:$0xff]
    %v363 = vld [vmem:[#allocation5 + $0x65c] sm:$0xff]
    %v364 = vld [vmem:[#allocation5 + $0x664] sm:$0xf]
    %v365 = vld [vmem:[#allocation5 + $0x668] sm:$0xff]
    %v366 = vld [vmem:[#allocation5 + $0x670] sm:$0xff]
    %v367 = vld [vmem:[#allocation5 + $0x678] sm:$0xf]
    %v368 = vld [vmem:[#allocation5 + $0x67c] sm:$0xff]
    %v369 = vld [vmem:[#allocation5 + $0x684] sm:$0xff]
    %v370 = vld [vmem:[#allocation5 + $0x68c] sm:$0xf]
    %v371 = vld [vmem:[#allocation5 + $0x690] sm:$0xff]
    %v372 = vld [vmem:[#allocation5 + $0x698] sm:$0xff]
    %v373 = vld [vmem:[#allocation5 + $0x6a0] sm:$0xf]
    %v374 = vld [vmem:[#allocation5 + $0x6a4] sm:$0xff]
    %v375 = vld [vmem:[#allocation5 + $0x6ac] sm:$0xff]
    %v376 = vld [vmem:[#allocation5 + $0x6b4] sm:$0xf]
    %v377 = vld [vmem:[#allocation5 + $0x6b8] sm:$0xff]
    %v378 = vld [vmem:[#allocation5 + $0x6c0] sm:$0xff]
    %v379 = vld [vmem:[#allocation5 + $0x6c8] sm:$0xf]
    %v380 = vld [vmem:[#allocation5 + $0x6cc] sm:$0xff]
    %v381 = vld [vmem:[#allocation5 + $0x6d4] sm:$0xff]
    %v382 = vld [vmem:[#allocation5 + $0x6dc] sm:$0xf]
    %v383 = vld [vmem:[#allocation5 + $0x6e0] sm:$0xff]
    %v384 = vld [vmem:[#allocation5 + $0x6e8] sm:$0xff]
    %v385 = vld [vmem:[#allocation5 + $0x6f0] sm:$0xf]
    %v386 = vld [vmem:[#allocation5 + $0x6f4] sm:$0xff]
    %v387 = vld [vmem:[#allocation5 + $0x6fc] sm:$0xff]
    %v388 = vld [vmem:[#allocation5 + $0x704] sm:$0xf]
    %v389 = vld [vmem:[#allocation5 + $0x708] sm:$0xff]
    %v390 = vld [vmem:[#allocation5 + $0x710] sm:$0xff]
    %v391 = vld [vmem:[#allocation5 + $0x718] sm:$0xf]
    %v392 = vld [vmem:[#allocation5 + $0x71c] sm:$0xff]
    %v393 = vld [vmem:[#allocation5 + $0x724] sm:$0xff]
    %v394 = vld [vmem:[#allocation5 + $0x72c] sm:$0xf]
    %v395 = vld [vmem:[#allocation5 + $0x730] sm:$0xff]
    %v396 = vld [vmem:[#allocation5 + $0x738] sm:$0xff]
    %v397 = vld [vmem:[#allocation5 + $0x740] sm:$0xf]
    %v398 = vld [vmem:[#allocation5 + $0x744] sm:$0xff]
    %v399 = vld [vmem:[#allocation5 + $0x74c] sm:$0xff]
    %v400 = vld [vmem:[#allocation5 + $0x754] sm:$0xf]
    %v401 = vld [vmem:[#allocation5 + $0x758] sm:$0xff]
    %v402 = vld [vmem:[#allocation5 + $0x760] sm:$0xff]
    %v403 = vld [vmem:[#allocation5 + $0x768] sm:$0xf]
    %v404 = vld [vmem:[#allocation5 + $0x76c] sm:$0xff]
    %v405 = vld [vmem:[#allocation5 + $0x774] sm:$0xff]
    %v406 = vld [vmem:[#allocation5 + $0x77c] sm:$0xf]
    %v407 = vld [vmem:[#allocation5 + $0x780] sm:$0xff]
    %v408 = vld [vmem:[#allocation5 + $0x788] sm:$0xff]
    %v409 = vld [vmem:[#allocation5 + $0x790] sm:$0xf]
    %v410 = vld [vmem:[#allocation5 + $0x794] sm:$0xff]
    %v411 = vld [vmem:[#allocation5 + $0x79c] sm:$0xff]
    %v412 = vld [vmem:[#allocation5 + $0x7a4] sm:$0xf]
    %v413 = vld [vmem:[#allocation5 + $0x7a8] sm:$0xff]
    %v414 = vld [vmem:[#allocation5 + $0x7b0] sm:$0xff]
    %v415 = vld [vmem:[#allocation5 + $0x7b8] sm:$0xf]
    %v416 = vld [vmem:[#allocation5 + $0x7bc] sm:$0xff]
    %v417 = vld [vmem:[#allocation5 + $0x7c4] sm:$0xff]
    %v418 = vld [vmem:[#allocation5 + $0x7cc] sm:$0xf]
    %v419 = vld [vmem:[#allocation5 + $0x7d0] sm:$0xff]
    %v420 = vld [vmem:[#allocation5 + $0x7d8] sm:$0xff]
    %v421 = vld [vmem:[#allocation5 + $0x7e0] sm:$0xf]
    %v422 = vld [vmem:[#allocation5 + $0x7e4] sm:$0xff]
    %v423 = vld [vmem:[#allocation5 + $0x7ec] sm:$0xff]
    %v424 = vld [vmem:[#allocation5 + $0x7f4] sm:$0xf]
    %v425 = vld [vmem:[#allocation5 + $0x7f8] sm:$0xff]
    %v426 = vld [vmem:[#allocation5 + $0x800] sm:$0xff]
    %v427 = vld [vmem:[#allocation5 + $0x808] sm:$0xf]
    %v428 = vld [vmem:[#allocation5 + $0x80c] sm:$0xff]
    %v429 = vld [vmem:[#allocation5 + $0x814] sm:$0xff]
    %v430 = vld [vmem:[#allocation5 + $0x81c] sm:$0xf]
    %v431 = vld [vmem:[#allocation5 + $0x820] sm:$0xff]
    %v432 = vld [vmem:[#allocation5 + $0x828] sm:$0xff]
    %v433 = vld [vmem:[#allocation5 + $0x830] sm:$0xf]
    %v434 = vld [vmem:[#allocation5 + $0x834] sm:$0xff]
    %v435 = vld [vmem:[#allocation5 + $0x83c] sm:$0xff]
    %v436 = vld [vmem:[#allocation5 + $0x844] sm:$0xf]
    %v437 = vld [vmem:[#allocation5 + $0x848] sm:$0xff]
    %v438 = vld [vmem:[#allocation5 + $0x850] sm:$0xff]
    %v439 = vld [vmem:[#allocation5 + $0x858] sm:$0xf]
    %v440 = vld [vmem:[#allocation5 + $0x85c] sm:$0xff]
    %v441 = vld [vmem:[#allocation5 + $0x864] sm:$0xff]
    %v442 = vld [vmem:[#allocation5 + $0x86c] sm:$0xf]
    %v443 = vld [vmem:[#allocation5 + $0x870] sm:$0xff]
    %v444 = vld [vmem:[#allocation5 + $0x878] sm:$0xff]
    %v445 = vld [vmem:[#allocation5 + $0x880] sm:$0xf]
    %v446 = vld [vmem:[#allocation5 + $0x884] sm:$0xff]
    %v447 = vld [vmem:[#allocation5 + $0x88c] sm:$0xff]
    %v448 = vld [vmem:[#allocation5 + $0x894] sm:$0xf]
    %v449 = vld [vmem:[#allocation5 + $0x898] sm:$0xff]
    %v450 = vld [vmem:[#allocation5 + $0x8a0] sm:$0xff]
    %v451 = vld [vmem:[#allocation5 + $0x8a8] sm:$0xf]
    %v452 = vld [vmem:[#allocation5 + $0x8ac] sm:$0xff]
    %v453 = vld [vmem:[#allocation5 + $0x8b4] sm:$0xff]
    %v454 = vld [vmem:[#allocation5 + $0x8bc] sm:$0xf]
    %v455 = vld [vmem:[#allocation7] sm:$0x1f]
    %v457 = vlaneseq
    %v458 = vshrl.u32 %v457, 7
    %v459 = vsub.s32 0, %v458
    %v460 = vrot.slane %v455, %v459
    %v461 = vlaneseq
    %v462 = vshrl.u32 %v461, 7
    %v463 = vsub.s32 1, %v462
    %v464 = vrot.slane %v455, %v463
    %v465 = vlaneseq
    %v466 = vshrl.u32 %v465, 7
    %v467 = vsub.s32 2, %v466
    %v468 = vrot.slane %v455, %v467
    %v469 = vlaneseq
    %v470 = vshrl.u32 %v469, 7
    %v471 = vsub.s32 3, %v470
    %v472 = vrot.slane %v455, %v471
    %v473 = vlaneseq
    %v474 = vshrl.u32 %v473, 7
    %v475 = vsub.s32 4, %v474
    %v476 = vrot.slane %v455, %v475
    %v486 = vunpack.c.l.b16 %v115
    %v487 = vunpack.c.h.b16 %v115
    %v488 = vunpack.c.l.b16 %v116
    %v489 = vunpack.c.h.b16 %v116
    %v490 = vunpack.c.l.b16 %v117
    %v491 = vunpack.c.h.b16 %v117
    %v492 = vunpack.c.l.b16 %v118
    %v493 = vpack.c.b16 %v486, %v486
    %v494 = vpack.c.b16 %v487, %v487
    %v495 = vpack.c.b16 %v488, %v488
    %v496 = vpack.c.b16 %v489, %v489
    %v497 = vpack.c.b16 %v490, %v490
    %v498 = vpack.c.b16 %v491, %v491
    %v499 = vpack.c.b16 %v492, %v492
    %v843 = vunpack.c.l.b16 %v119
    %v844 = vunpack.c.h.b16 %v119
    %v845 = vunpack.c.l.b16 %v120
    %v846 = vunpack.c.h.b16 %v120
    %v847 = vunpack.c.l.b16 %v121
    %v848 = vunpack.c.l.b16 %v122
    %v849 = vunpack.c.h.b16 %v122
    %v850 = vunpack.c.l.b16 %v123
    %v851 = vunpack.c.h.b16 %v123
    %v852 = vunpack.c.l.b16 %v124
    %v853 = vunpack.c.l.b16 %v125
    %v854 = vunpack.c.h.b16 %v125
    %v855 = vunpack.c.l.b16 %v126
    %v856 = vunpack.c.h.b16 %v126
    %v857 = vunpack.c.l.b16 %v127
    %v858 = vunpack.c.l.b16 %v128
    %v859 = vunpack.c.h.b16 %v128
    %v860 = vunpack.c.l.b16 %v129
    %v861 = vunpack.c.h.b16 %v129
    %v862 = vunpack.c.l.b16 %v130
    %v863 = vunpack.c.l.b16 %v131
    %v864 = vunpack.c.h.b16 %v131
    %v865 = vunpack.c.l.b16 %v132
    %v866 = vunpack.c.h.b16 %v132
    %v867 = vunpack.c.l.b16 %v133
    %v868 = vunpack.c.l.b16 %v134
    %v869 = vunpack.c.h.b16 %v134
    %v870 = vunpack.c.l.b16 %v135
    %v871 = vunpack.c.h.b16 %v135
    %v872 = vunpack.c.l.b16 %v136
    %v873 = vunpack.c.l.b16 %v137
    %v874 = vunpack.c.h.b16 %v137
    %v875 = vunpack.c.l.b16 %v138
    %v876 = vunpack.c.h.b16 %v138
    %v877 = vunpack.c.l.b16 %v139
    %v878 = vunpack.c.l.b16 %v140
    %v879 = vunpack.c.h.b16 %v140
    %v880 = vunpack.c.l.b16 %v141
    %v881 = vunpack.c.h.b16 %v141
    %v882 = vunpack.c.l.b16 %v142
    %v883 = vunpack.c.l.b16 %v143
    %v884 = vunpack.c.h.b16 %v143
    %v885 = vunpack.c.l.b16 %v144
    %v886 = vunpack.c.h.b16 %v144
    %v887 = vunpack.c.l.b16 %v145
    %v888 = vunpack.c.l.b16 %v146
    %v889 = vunpack.c.h.b16 %v146
    %v890 = vunpack.c.l.b16 %v147
    %v891 = vunpack.c.h.b16 %v147
    %v892 = vunpack.c.l.b16 %v148
    %v893 = vunpack.c.l.b16 %v149
    %v894 = vunpack.c.h.b16 %v149
    %v895 = vunpack.c.l.b16 %v150
    %v896 = vunpack.c.h.b16 %v150
    %v897 = vunpack.c.l.b16 %v151
    %v898 = vunpack.c.l.b16 %v152
    %v899 = vunpack.c.h.b16 %v152
    %v900 = vunpack.c.l.b16 %v153
    %v901 = vunpack.c.h.b16 %v153
    %v902 = vunpack.c.l.b16 %v154
    %v903 = vunpack.c.l.b16 %v155
    %v904 = vunpack.c.h.b16 %v155
    %v905 = vunpack.c.l.b16 %v156
    %v906 = vunpack.c.h.b16 %v156
    %v907 = vunpack.c.l.b16 %v157
    %v908 = vunpack.c.l.b16 %v158
    %v909 = vunpack.c.h.b16 %v158
    %v910 = vunpack.c.l.b16 %v159
    %v911 = vunpack.c.h.b16 %v159
    %v912 = vunpack.c.l.b16 %v160
    %v913 = vunpack.c.l.b16 %v161
    %v914 = vunpack.c.h.b16 %v161
    %v915 = vunpack.c.l.b16 %v162
    %v916 = vunpack.c.h.b16 %v162
    %v917 = vunpack.c.l.b16 %v163
    %v918 = vunpack.c.l.b16 %v164
    %v919 = vunpack.c.h.b16 %v164
    %v920 = vunpack.c.l.b16 %v165
    %v921 = vunpack.c.h.b16 %v165
    %v922 = vunpack.c.l.b16 %v166
    %v923 = vunpack.c.l.b16 %v167
    %v924 = vunpack.c.h.b16 %v167
    %v925 = vunpack.c.l.b16 %v168
    %v926 = vunpack.c.h.b16 %v168
    %v927 = vunpack.c.l.b16 %v169
    %v928 = vunpack.c.l.b16 %v170
    %v929 = vunpack.c.h.b16 %v170
    %v930 = vunpack.c.l.b16 %v171
    %v931 = vunpack.c.h.b16 %v171
    %v932 = vunpack.c.l.b16 %v172
    %v933 = vunpack.c.l.b16 %v173
    %v934 = vunpack.c.h.b16 %v173
    %v935 = vunpack.c.l.b16 %v174
    %v936 = vunpack.c.h.b16 %v174
    %v937 = vunpack.c.l.b16 %v175
    %v938 = vunpack.c.l.b16 %v176
    %v939 = vunpack.c.h.b16 %v176
    %v940 = vunpack.c.l.b16 %v177
    %v941 = vunpack.c.h.b16 %v177
    %v942 = vunpack.c.l.b16 %v178
    %v943 = vunpack.c.l.b16 %v179
    %v944 = vunpack.c.h.b16 %v179
    %v945 = vunpack.c.l.b16 %v180
    %v946 = vunpack.c.h.b16 %v180
    %v947 = vunpack.c.l.b16 %v181
    %v948 = vunpack.c.l.b16 %v182
    %v949 = vunpack.c.h.b16 %v182
    %v950 = vunpack.c.l.b16 %v183
    %v951 = vunpack.c.h.b16 %v183
    %v952 = vunpack.c.l.b16 %v184
    %v953 = vunpack.c.l.b16 %v185
    %v954 = vunpack.c.h.b16 %v185
    %v955 = vunpack.c.l.b16 %v186
    %v956 = vunpack.c.h.b16 %v186
    %v957 = vunpack.c.l.b16 %v187
    %v958 = vunpack.c.l.b16 %v188
    %v959 = vunpack.c.h.b16 %v188
    %v960 = vunpack.c.l.b16 %v189
    %v961 = vunpack.c.h.b16 %v189
    %v962 = vunpack.c.l.b16 %v190
    %v963 = vunpack.c.l.b16 %v191
    %v964 = vunpack.c.h.b16 %v191
    %v965 = vunpack.c.l.b16 %v192
    %v966 = vunpack.c.h.b16 %v192
    %v967 = vunpack.c.l.b16 %v193
    %v968 = vunpack.c.l.b16 %v194
    %v969 = vunpack.c.h.b16 %v194
    %v970 = vunpack.c.l.b16 %v195
    %v971 = vunpack.c.h.b16 %v195
    %v972 = vunpack.c.l.b16 %v196
    %v973 = vunpack.c.l.b16 %v197
    %v974 = vunpack.c.h.b16 %v197
    %v975 = vunpack.c.l.b16 %v198
    %v976 = vunpack.c.h.b16 %v198
    %v977 = vunpack.c.l.b16 %v199
    %v978 = vunpack.c.l.b16 %v200
    %v979 = vunpack.c.h.b16 %v200
    %v980 = vunpack.c.l.b16 %v201
    %v981 = vunpack.c.h.b16 %v201
    %v982 = vunpack.c.l.b16 %v202
    %v983 = vunpack.c.l.b16 %v203
    %v984 = vunpack.c.h.b16 %v203
    %v985 = vunpack.c.l.b16 %v204
    %v986 = vunpack.c.h.b16 %v204
    %v987 = vunpack.c.l.b16 %v205
    %v988 = vunpack.c.l.b16 %v206
    %v989 = vunpack.c.h.b16 %v206
    %v990 = vunpack.c.l.b16 %v207
    %v991 = vunpack.c.h.b16 %v207
    %v992 = vunpack.c.l.b16 %v208
    %v993 = vunpack.c.l.b16 %v209
    %v994 = vunpack.c.h.b16 %v209
    %v995 = vunpack.c.l.b16 %v210
    %v996 = vunpack.c.h.b16 %v210
    %v997 = vunpack.c.l.b16 %v211
    %v998 = vunpack.c.l.b16 %v212
    %v999 = vunpack.c.h.b16 %v212
    %v1000 = vunpack.c.l.b16 %v213
    %v1001 = vunpack.c.h.b16 %v213
    %v1002 = vunpack.c.l.b16 %v214
    %v1003 = vunpack.c.l.b16 %v215
    %v1004 = vunpack.c.h.b16 %v215
    %v1005 = vunpack.c.l.b16 %v216
    %v1006 = vunpack.c.h.b16 %v216
    %v1007 = vunpack.c.l.b16 %v217
    %v1008 = vunpack.c.l.b16 %v218
    %v1009 = vunpack.c.h.b16 %v218
    %v1010 = vunpack.c.l.b16 %v219
    %v1011 = vunpack.c.h.b16 %v219
    %v1012 = vunpack.c.l.b16 %v220
    %v1013 = vunpack.c.l.b16 %v221
    %v1014 = vunpack.c.h.b16 %v221
    %v1015 = vunpack.c.l.b16 %v222
    %v1016 = vunpack.c.h.b16 %v222
    %v1017 = vunpack.c.l.b16 %v223
    %v1018 = vunpack.c.l.b16 %v224
    %v1019 = vunpack.c.h.b16 %v224
    %v1020 = vunpack.c.l.b16 %v225
    %v1021 = vunpack.c.h.b16 %v225
    %v1022 = vunpack.c.l.b16 %v226
    %v1023 = vunpack.c.l.b16 %v227
    %v1024 = vunpack.c.h.b16 %v227
    %v1025 = vunpack.c.l.b16 %v228
    %v1026 = vunpack.c.h.b16 %v228
    %v1027 = vunpack.c.l.b16 %v229
    %v1028 = vunpack.c.l.b16 %v230
    %v1029 = vunpack.c.h.b16 %v230
    %v1030 = vunpack.c.l.b16 %v231
    %v1031 = vunpack.c.h.b16 %v231
    %v1032 = vunpack.c.l.b16 %v232
    %v1033 = vunpack.c.l.b16 %v233
    %v1034 = vunpack.c.h.b16 %v233
    %v1035 = vunpack.c.l.b16 %v234
    %v1036 = vunpack.c.h.b16 %v234
    %v1037 = vunpack.c.l.b16 %v235
    %v1038 = vunpack.c.l.b16 %v236
    %v1039 = vunpack.c.h.b16 %v236
    %v1040 = vunpack.c.l.b16 %v237
    %v1041 = vunpack.c.h.b16 %v237
    %v1042 = vunpack.c.l.b16 %v238
    %v1043 = vunpack.c.l.b16 %v239
    %v1044 = vunpack.c.h.b16 %v239
    %v1045 = vunpack.c.l.b16 %v240
    %v1046 = vunpack.c.h.b16 %v240
    %v1047 = vunpack.c.l.b16 %v241
    %v1048 = vunpack.c.l.b16 %v242
    %v1049 = vunpack.c.h.b16 %v242
    %v1050 = vunpack.c.l.b16 %v243
    %v1051 = vunpack.c.h.b16 %v243
    %v1052 = vunpack.c.l.b16 %v244
    %v1053 = vunpack.c.l.b16 %v245
    %v1054 = vunpack.c.h.b16 %v245
    %v1055 = vunpack.c.l.b16 %v246
    %v1056 = vunpack.c.h.b16 %v246
    %v1057 = vunpack.c.l.b16 %v247
    %v1058 = vunpack.c.l.b16 %v248
    %v1059 = vunpack.c.h.b16 %v248
    %v1060 = vunpack.c.l.b16 %v249
    %v1061 = vunpack.c.h.b16 %v249
    %v1062 = vunpack.c.l.b16 %v250
    %v1063 = vunpack.c.l.b16 %v251
    %v1064 = vunpack.c.h.b16 %v251
    %v1065 = vunpack.c.l.b16 %v252
    %v1066 = vunpack.c.h.b16 %v252
    %v1067 = vunpack.c.l.b16 %v253
    %v1068 = vunpack.c.l.b16 %v254
    %v1069 = vunpack.c.h.b16 %v254
    %v1070 = vunpack.c.l.b16 %v255
    %v1071 = vunpack.c.h.b16 %v255
    %v1072 = vunpack.c.l.b16 %v256
    %v1073 = vunpack.c.l.b16 %v257
    %v1074 = vunpack.c.h.b16 %v257
    %v1075 = vunpack.c.l.b16 %v258
    %v1076 = vunpack.c.h.b16 %v258
    %v1077 = vunpack.c.l.b16 %v259
    %v1078 = vunpack.c.l.b16 %v260
    %v1079 = vunpack.c.h.b16 %v260
    %v1080 = vunpack.c.l.b16 %v261
    %v1081 = vunpack.c.h.b16 %v261
    %v1082 = vunpack.c.l.b16 %v262
    %v1083 = vunpack.c.l.b16 %v263
    %v1084 = vunpack.c.h.b16 %v263
    %v1085 = vunpack.c.l.b16 %v264
    %v1086 = vunpack.c.h.b16 %v264
    %v1087 = vunpack.c.l.b16 %v265
    %v1088 = vunpack.c.l.b16 %v266
    %v1089 = vunpack.c.h.b16 %v266
    %v1090 = vunpack.c.l.b16 %v267
    %v1091 = vunpack.c.h.b16 %v267
    %v1092 = vunpack.c.l.b16 %v268
    %v1093 = vunpack.c.l.b16 %v269
    %v1094 = vunpack.c.h.b16 %v269
    %v1095 = vunpack.c.l.b16 %v270
    %v1096 = vunpack.c.h.b16 %v270
    %v1097 = vunpack.c.l.b16 %v271
    %v1098 = vunpack.c.l.b16 %v272
    %v1099 = vunpack.c.h.b16 %v272
    %v1100 = vunpack.c.l.b16 %v273
    %v1101 = vunpack.c.h.b16 %v273
    %v1102 = vunpack.c.l.b16 %v274
    %v1103 = vunpack.c.l.b16 %v275
    %v1104 = vunpack.c.h.b16 %v275
    %v1105 = vunpack.c.l.b16 %v276
    %v1106 = vunpack.c.h.b16 %v276
    %v1107 = vunpack.c.l.b16 %v277
    %v1108 = vunpack.c.l.b16 %v278
    %v1109 = vunpack.c.h.b16 %v278
    %v1110 = vunpack.c.l.b16 %v279
    %v1111 = vunpack.c.h.b16 %v279
    %v1112 = vunpack.c.l.b16 %v280
    %v1113 = vunpack.c.l.b16 %v281
    %v1114 = vunpack.c.h.b16 %v281
    %v1115 = vunpack.c.l.b16 %v282
    %v1116 = vunpack.c.h.b16 %v282
    %v1117 = vunpack.c.l.b16 %v283
    %v1118 = vunpack.c.l.b16 %v284
    %v1119 = vunpack.c.h.b16 %v284
    %v1120 = vunpack.c.l.b16 %v285
    %v1121 = vunpack.c.h.b16 %v285
    %v1122 = vunpack.c.l.b16 %v286
    %v1123 = vunpack.c.l.b16 %v287
    %v1124 = vunpack.c.h.b16 %v287
    %v1125 = vunpack.c.l.b16 %v288
    %v1126 = vunpack.c.h.b16 %v288
    %v1127 = vunpack.c.l.b16 %v289
    %v1128 = vunpack.c.l.b16 %v290
    %v1129 = vunpack.c.h.b16 %v290
    %v1130 = vunpack.c.l.b16 %v291
    %v1131 = vunpack.c.h.b16 %v291
    %v1132 = vunpack.c.l.b16 %v292
    %v1133 = vunpack.c.l.b16 %v293
    %v1134 = vunpack.c.h.b16 %v293
    %v1135 = vunpack.c.l.b16 %v294
    %v1136 = vunpack.c.h.b16 %v294
    %v1137 = vunpack.c.l.b16 %v295
    %v1138 = vunpack.c.l.b16 %v296
    %v1139 = vunpack.c.h.b16 %v296
    %v1140 = vunpack.c.l.b16 %v297
    %v1141 = vunpack.c.h.b16 %v297
    %v1142 = vunpack.c.l.b16 %v298
    %v1143 = vunpack.c.l.b16 %v299
    %v1144 = vunpack.c.h.b16 %v299
    %v1145 = vunpack.c.l.b16 %v300
    %v1146 = vunpack.c.h.b16 %v300
    %v1147 = vunpack.c.l.b16 %v301
    %v1148 = vunpack.c.l.b16 %v302
    %v1149 = vunpack.c.h.b16 %v302
    %v1150 = vunpack.c.l.b16 %v303
    %v1151 = vunpack.c.h.b16 %v303
    %v1152 = vunpack.c.l.b16 %v304
    %v1153 = vunpack.c.l.b16 %v305
    %v1154 = vunpack.c.h.b16 %v305
    %v1155 = vunpack.c.l.b16 %v306
    %v1156 = vunpack.c.h.b16 %v306
    %v1157 = vunpack.c.l.b16 %v307
    %v1158 = vunpack.c.l.b16 %v308
    %v1159 = vunpack.c.h.b16 %v308
    %v1160 = vunpack.c.l.b16 %v309
    %v1161 = vunpack.c.h.b16 %v309
    %v1162 = vunpack.c.l.b16 %v310
    %v1163 = vunpack.c.l.b16 %v311
    %v1164 = vunpack.c.h.b16 %v311
    %v1165 = vunpack.c.l.b16 %v312
    %v1166 = vunpack.c.h.b16 %v312
    %v1167 = vunpack.c.l.b16 %v313
    %v1168 = vunpack.c.l.b16 %v314
    %v1169 = vunpack.c.h.b16 %v314
    %v1170 = vunpack.c.l.b16 %v315
    %v1171 = vunpack.c.h.b16 %v315
    %v1172 = vunpack.c.l.b16 %v316
    %v1173 = vunpack.c.l.b16 %v317
    %v1174 = vunpack.c.h.b16 %v317
    %v1175 = vunpack.c.l.b16 %v318
    %v1176 = vunpack.c.h.b16 %v318
    %v1177 = vunpack.c.l.b16 %v319
    %v1178 = vunpack.c.l.b16 %v320
    %v1179 = vunpack.c.h.b16 %v320
    %v1180 = vunpack.c.l.b16 %v321
    %v1181 = vunpack.c.h.b16 %v321
    %v1182 = vunpack.c.l.b16 %v322
    %v1183 = vunpack.c.l.b16 %v323
    %v1184 = vunpack.c.h.b16 %v323
    %v1185 = vunpack.c.l.b16 %v324
    %v1186 = vunpack.c.h.b16 %v324
    %v1187 = vunpack.c.l.b16 %v325
    %v1188 = vunpack.c.l.b16 %v326
    %v1189 = vunpack.c.h.b16 %v326
    %v1190 = vunpack.c.l.b16 %v327
    %v1191 = vunpack.c.h.b16 %v327
    %v1192 = vunpack.c.l.b16 %v328
    %v1193 = vunpack.c.l.b16 %v329
    %v1194 = vunpack.c.h.b16 %v329
    %v1195 = vunpack.c.l.b16 %v330
    %v1196 = vunpack.c.h.b16 %v330
    %v1197 = vunpack.c.l.b16 %v331
    %v1198 = vunpack.c.l.b16 %v332
    %v1199 = vunpack.c.h.b16 %v332
    %v1200 = vunpack.c.l.b16 %v333
    %v1201 = vunpack.c.h.b16 %v333
    %v1202 = vunpack.c.l.b16 %v334
    %v1203 = vunpack.c.l.b16 %v335
    %v1204 = vunpack.c.h.b16 %v335
    %v1205 = vunpack.c.l.b16 %v336
    %v1206 = vunpack.c.h.b16 %v336
    %v1207 = vunpack.c.l.b16 %v337
    %v1208 = vunpack.c.l.b16 %v338
    %v1209 = vunpack.c.h.b16 %v338
    %v1210 = vunpack.c.l.b16 %v339
    %v1211 = vunpack.c.h.b16 %v339
    %v1212 = vunpack.c.l.b16 %v340
    %v1213 = vunpack.c.l.b16 %v341
    %v1214 = vunpack.c.h.b16 %v341
    %v1215 = vunpack.c.l.b16 %v342
    %v1216 = vunpack.c.h.b16 %v342
    %v1217 = vunpack.c.l.b16 %v343
    %v1218 = vunpack.c.l.b16 %v344
    %v1219 = vunpack.c.h.b16 %v344
    %v1220 = vunpack.c.l.b16 %v345
    %v1221 = vunpack.c.h.b16 %v345
    %v1222 = vunpack.c.l.b16 %v346
    %v1223 = vunpack.c.l.b16 %v347
    %v1224 = vunpack.c.h.b16 %v347
    %v1225 = vunpack.c.l.b16 %v348
    %v1226 = vunpack.c.h.b16 %v348
    %v1227 = vunpack.c.l.b16 %v349
    %v1228 = vunpack.c.l.b16 %v350
    %v1229 = vunpack.c.h.b16 %v350
    %v1230 = vunpack.c.l.b16 %v351
    %v1231 = vunpack.c.h.b16 %v351
    %v1232 = vunpack.c.l.b16 %v352
    %v1233 = vunpack.c.l.b16 %v353
    %v1234 = vunpack.c.h.b16 %v353
    %v1235 = vunpack.c.l.b16 %v354
    %v1236 = vunpack.c.h.b16 %v354
    %v1237 = vunpack.c.l.b16 %v355
    %v1238 = vunpack.c.l.b16 %v356
    %v1239 = vunpack.c.h.b16 %v356
    %v1240 = vunpack.c.l.b16 %v357
    %v1241 = vunpack.c.h.b16 %v357
    %v1242 = vunpack.c.l.b16 %v358
    %v1243 = vunpack.c.l.b16 %v359
    %v1244 = vunpack.c.h.b16 %v359
    %v1245 = vunpack.c.l.b16 %v360
    %v1246 = vunpack.c.h.b16 %v360
    %v1247 = vunpack.c.l.b16 %v361
    %v1248 = vunpack.c.l.b16 %v362
    %v1249 = vunpack.c.h.b16 %v362
    %v1250 = vunpack.c.l.b16 %v363
    %v1251 = vunpack.c.h.b16 %v363
    %v1252 = vunpack.c.l.b16 %v364
    %v1253 = vunpack.c.l.b16 %v365
    %v1254 = vunpack.c.h.b16 %v365
    %v1255 = vunpack.c.l.b16 %v366
    %v1256 = vunpack.c.h.b16 %v366
    %v1257 = vunpack.c.l.b16 %v367
    %v1258 = vunpack.c.l.b16 %v368
    %v1259 = vunpack.c.h.b16 %v368
    %v1260 = vunpack.c.l.b16 %v369
    %v1261 = vunpack.c.h.b16 %v369
    %v1262 = vunpack.c.l.b16 %v370
    %v1263 = vunpack.c.l.b16 %v371
    %v1264 = vunpack.c.h.b16 %v371
    %v1265 = vunpack.c.l.b16 %v372
    %v1266 = vunpack.c.h.b16 %v372
    %v1267 = vunpack.c.l.b16 %v373
    %v1268 = vunpack.c.l.b16 %v374
    %v1269 = vunpack.c.h.b16 %v374
    %v1270 = vunpack.c.l.b16 %v375
    %v1271 = vunpack.c.h.b16 %v375
    %v1272 = vunpack.c.l.b16 %v376
    %v1273 = vunpack.c.l.b16 %v377
    %v1274 = vunpack.c.h.b16 %v377
    %v1275 = vunpack.c.l.b16 %v378
    %v1276 = vunpack.c.h.b16 %v378
    %v1277 = vunpack.c.l.b16 %v379
    %v1278 = vunpack.c.l.b16 %v380
    %v1279 = vunpack.c.h.b16 %v380
    %v1280 = vunpack.c.l.b16 %v381
    %v1281 = vunpack.c.h.b16 %v381
    %v1282 = vunpack.c.l.b16 %v382
    %v1283 = vunpack.c.l.b16 %v383
    %v1284 = vunpack.c.h.b16 %v383
    %v1285 = vunpack.c.l.b16 %v384
    %v1286 = vunpack.c.h.b16 %v384
    %v1287 = vunpack.c.l.b16 %v385
    %v1288 = vunpack.c.l.b16 %v386
    %v1289 = vunpack.c.h.b16 %v386
    %v1290 = vunpack.c.l.b16 %v387
    %v1291 = vunpack.c.h.b16 %v387
    %v1292 = vunpack.c.l.b16 %v388
    %v1293 = vunpack.c.l.b16 %v389
    %v1294 = vunpack.c.h.b16 %v389
    %v1295 = vunpack.c.l.b16 %v390
    %v1296 = vunpack.c.h.b16 %v390
    %v1297 = vunpack.c.l.b16 %v391
    %v1298 = vunpack.c.l.b16 %v392
    %v1299 = vunpack.c.h.b16 %v392
    %v1300 = vunpack.c.l.b16 %v393
    %v1301 = vunpack.c.h.b16 %v393
    %v1302 = vunpack.c.l.b16 %v394
    %v1303 = vunpack.c.l.b16 %v395
    %v1304 = vunpack.c.h.b16 %v395
    %v1305 = vunpack.c.l.b16 %v396
    %v1306 = vunpack.c.h.b16 %v396
    %v1307 = vunpack.c.l.b16 %v397
    %v1308 = vunpack.c.l.b16 %v398
    %v1309 = vunpack.c.h.b16 %v398
    %v1310 = vunpack.c.l.b16 %v399
    %v1311 = vunpack.c.h.b16 %v399
    %v1312 = vunpack.c.l.b16 %v400
    %v1313 = vunpack.c.l.b16 %v401
    %v1314 = vunpack.c.h.b16 %v401
    %v1315 = vunpack.c.l.b16 %v402
    %v1316 = vunpack.c.h.b16 %v402
    %v1317 = vunpack.c.l.b16 %v403
    %v1318 = vunpack.c.l.b16 %v404
    %v1319 = vunpack.c.h.b16 %v404
    %v1320 = vunpack.c.l.b16 %v405
    %v1321 = vunpack.c.h.b16 %v405
    %v1322 = vunpack.c.l.b16 %v406
    %v1323 = vunpack.c.l.b16 %v407
    %v1324 = vunpack.c.h.b16 %v407
    %v1325 = vunpack.c.l.b16 %v408
    %v1326 = vunpack.c.h.b16 %v408
    %v1327 = vunpack.c.l.b16 %v409
    %v1328 = vunpack.c.l.b16 %v410
    %v1329 = vunpack.c.h.b16 %v410
    %v1330 = vunpack.c.l.b16 %v411
    %v1331 = vunpack.c.h.b16 %v411
    %v1332 = vunpack.c.l.b16 %v412
    %v1333 = vunpack.c.l.b16 %v413
    %v1334 = vunpack.c.h.b16 %v413
    %v1335 = vunpack.c.l.b16 %v414
    %v1336 = vunpack.c.h.b16 %v414
    %v1337 = vunpack.c.l.b16 %v415
    %v1338 = vunpack.c.l.b16 %v416
    %v1339 = vunpack.c.h.b16 %v416
    %v1340 = vunpack.c.l.b16 %v417
    %v1341 = vunpack.c.h.b16 %v417
    %v1342 = vunpack.c.l.b16 %v418
    %v1343 = vunpack.c.l.b16 %v419
    %v1344 = vunpack.c.h.b16 %v419
    %v1345 = vunpack.c.l.b16 %v420
    %v1346 = vunpack.c.h.b16 %v420
    %v1347 = vunpack.c.l.b16 %v421
    %v1348 = vunpack.c.l.b16 %v422
    %v1349 = vunpack.c.h.b16 %v422
    %v1350 = vunpack.c.l.b16 %v423
    %v1351 = vunpack.c.h.b16 %v423
    %v1352 = vunpack.c.l.b16 %v424
    %v1353 = vunpack.c.l.b16 %v425
    %v1354 = vunpack.c.h.b16 %v425
    %v1355 = vunpack.c.l.b16 %v426
    %v1356 = vunpack.c.h.b16 %v426
    %v1357 = vunpack.c.l.b16 %v427
    %v1358 = vunpack.c.l.b16 %v428
    %v1359 = vunpack.c.h.b16 %v428
    %v1360 = vunpack.c.l.b16 %v429
    %v1361 = vunpack.c.h.b16 %v429
    %v1362 = vunpack.c.l.b16 %v430
    %v1363 = vunpack.c.l.b16 %v431
    %v1364 = vunpack.c.h.b16 %v431
    %v1365 = vunpack.c.l.b16 %v432
    %v1366 = vunpack.c.h.b16 %v432
    %v1367 = vunpack.c.l.b16 %v433
    %v1368 = vunpack.c.l.b16 %v434
    %v1369 = vunpack.c.h.b16 %v434
    %v1370 = vunpack.c.l.b16 %v435
    %v1371 = vunpack.c.h.b16 %v435
    %v1372 = vunpack.c.l.b16 %v436
    %v1373 = vunpack.c.l.b16 %v437
    %v1374 = vunpack.c.h.b16 %v437
    %v1375 = vunpack.c.l.b16 %v438
    %v1376 = vunpack.c.h.b16 %v438
    %v1377 = vunpack.c.l.b16 %v439
    %v1378 = vunpack.c.l.b16 %v440
    %v1379 = vunpack.c.h.b16 %v440
    %v1380 = vunpack.c.l.b16 %v441
    %v1381 = vunpack.c.h.b16 %v441
    %v1382 = vunpack.c.l.b16 %v442
    %v1383 = vunpack.c.l.b16 %v443
    %v1384 = vunpack.c.h.b16 %v443
    %v1385 = vunpack.c.l.b16 %v444
    %v1386 = vunpack.c.h.b16 %v444
    %v1387 = vunpack.c.l.b16 %v445
    %v1388 = vunpack.c.l.b16 %v446
    %v1389 = vunpack.c.h.b16 %v446
    %v1390 = vunpack.c.l.b16 %v447
    %v1391 = vunpack.c.h.b16 %v447
    %v1392 = vunpack.c.l.b16 %v448
    %v1393 = vunpack.c.l.b16 %v449
    %v1394 = vunpack.c.h.b16 %v449
    %v1395 = vunpack.c.l.b16 %v450
    %v1396 = vunpack.c.h.b16 %v450
    %v1397 = vunpack.c.l.b16 %v451
    %v1398 = vunpack.c.l.b16 %v452
    %v1399 = vunpack.c.h.b16 %v452
    %v1400 = vunpack.c.l.b16 %v453
    %v1401 = vunpack.c.h.b16 %v453
    %v1402 = vunpack.c.l.b16 %v454
    %v1403 = vpack.c.b16 %v848, %v843
    %v1404 = vpack.c.b16 %v849, %v844
    %v1405 = vpack.c.b16 %v850, %v845
    %v1406 = vpack.c.b16 %v851, %v846
    %v1407 = vpack.c.b16 %v852, %v847
    %v1408 = vpack.c.b16 %v858, %v853
    %v1409 = vpack.c.b16 %v859, %v854
    %v1410 = vpack.c.b16 %v860, %v855
    %v1411 = vpack.c.b16 %v861, %v856
    %v1412 = vpack.c.b16 %v862, %v857
    %v1413 = vpack.c.b16 %v868, %v863
    %v1414 = vpack.c.b16 %v869, %v864
    %v1415 = vpack.c.b16 %v870, %v865
    %v1416 = vpack.c.b16 %v871, %v866
    %v1417 = vpack.c.b16 %v872, %v867
    %v1418 = vpack.c.b16 %v878, %v873
    %v1419 = vpack.c.b16 %v879, %v874
    %v1420 = vpack.c.b16 %v880, %v875
    %v1421 = vpack.c.b16 %v881, %v876
    %v1422 = vpack.c.b16 %v882, %v877
    %v1423 = vpack.c.b16 %v888, %v883
    %v1424 = vpack.c.b16 %v889, %v884
    %v1425 = vpack.c.b16 %v890, %v885
    %v1426 = vpack.c.b16 %v891, %v886
    %v1427 = vpack.c.b16 %v892, %v887
    %v1428 = vpack.c.b16 %v898, %v893
    %v1429 = vpack.c.b16 %v899, %v894
    %v1430 = vpack.c.b16 %v900, %v895
    %v1431 = vpack.c.b16 %v901, %v896
    %v1432 = vpack.c.b16 %v902, %v897
    %v1433 = vpack.c.b16 %v908, %v903
    %v1434 = vpack.c.b16 %v909, %v904
    %v1435 = vpack.c.b16 %v910, %v905
    %v1436 = vpack.c.b16 %v911, %v906
    %v1437 = vpack.c.b16 %v912, %v907
    %v1438 = vpack.c.b16 %v918, %v913
    %v1439 = vpack.c.b16 %v919, %v914
    %v1440 = vpack.c.b16 %v920, %v915
    %v1441 = vpack.c.b16 %v921, %v916
    %v1442 = vpack.c.b16 %v922, %v917
    %v1443 = vpack.c.b16 %v928, %v923
    %v1444 = vpack.c.b16 %v929, %v924
    %v1445 = vpack.c.b16 %v930, %v925
    %v1446 = vpack.c.b16 %v931, %v926
    %v1447 = vpack.c.b16 %v932, %v927
    %v1448 = vpack.c.b16 %v938, %v933
    %v1449 = vpack.c.b16 %v939, %v934
    %v1450 = vpack.c.b16 %v940, %v935
    %v1451 = vpack.c.b16 %v941, %v936
    %v1452 = vpack.c.b16 %v942, %v937
    %v1453 = vpack.c.b16 %v948, %v943
    %v1454 = vpack.c.b16 %v949, %v944
    %v1455 = vpack.c.b16 %v950, %v945
    %v1456 = vpack.c.b16 %v951, %v946
    %v1457 = vpack.c.b16 %v952, %v947
    %v1458 = vpack.c.b16 %v958, %v953
    %v1459 = vpack.c.b16 %v959, %v954
    %v1460 = vpack.c.b16 %v960, %v955
    %v1461 = vpack.c.b16 %v961, %v956
    %v1462 = vpack.c.b16 %v962, %v957
    %v1463 = vpack.c.b16 %v968, %v963
    %v1464 = vpack.c.b16 %v969, %v964
    %v1465 = vpack.c.b16 %v970, %v965
    %v1466 = vpack.c.b16 %v971, %v966
    %v1467 = vpack.c.b16 %v972, %v967
    %v1468 = vpack.c.b16 %v978, %v973
    %v1469 = vpack.c.b16 %v979, %v974
    %v1470 = vpack.c.b16 %v980, %v975
    %v1471 = vpack.c.b16 %v981, %v976
    %v1472 = vpack.c.b16 %v982, %v977
    %v1473 = vpack.c.b16 %v988, %v983
    %v1474 = vpack.c.b16 %v989, %v984
    %v1475 = vpack.c.b16 %v990, %v985
    %v1476 = vpack.c.b16 %v991, %v986
    %v1477 = vpack.c.b16 %v992, %v987
    %v1478 = vpack.c.b16 %v998, %v993
    %v1479 = vpack.c.b16 %v999, %v994
    %v1480 = vpack.c.b16 %v1000, %v995
    %v1481 = vpack.c.b16 %v1001, %v996
    %v1482 = vpack.c.b16 %v1002, %v997
    %v1483 = vpack.c.b16 %v1008, %v1003
    %v1484 = vpack.c.b16 %v1009, %v1004
    %v1485 = vpack.c.b16 %v1010, %v1005
    %v1486 = vpack.c.b16 %v1011, %v1006
    %v1487 = vpack.c.b16 %v1012, %v1007
    %v1488 = vpack.c.b16 %v1018, %v1013
    %v1489 = vpack.c.b16 %v1019, %v1014
    %v1490 = vpack.c.b16 %v1020, %v1015
    %v1491 = vpack.c.b16 %v1021, %v1016
    %v1492 = vpack.c.b16 %v1022, %v1017
    %v1493 = vpack.c.b16 %v1028, %v1023
    %v1494 = vpack.c.b16 %v1029, %v1024
    %v1495 = vpack.c.b16 %v1030, %v1025
    %v1496 = vpack.c.b16 %v1031, %v1026
    %v1497 = vpack.c.b16 %v1032, %v1027
    %v1498 = vpack.c.b16 %v1038, %v1033
    %v1499 = vpack.c.b16 %v1039, %v1034
    %v1500 = vpack.c.b16 %v1040, %v1035
    %v1501 = vpack.c.b16 %v1041, %v1036
    %v1502 = vpack.c.b16 %v1042, %v1037
    %v1503 = vpack.c.b16 %v1048, %v1043
    %v1504 = vpack.c.b16 %v1049, %v1044
    %v1505 = vpack.c.b16 %v1050, %v1045
    %v1506 = vpack.c.b16 %v1051, %v1046
    %v1507 = vpack.c.b16 %v1052, %v1047
    %v1508 = vpack.c.b16 %v1058, %v1053
    %v1509 = vpack.c.b16 %v1059, %v1054
    %v1510 = vpack.c.b16 %v1060, %v1055
    %v1511 = vpack.c.b16 %v1061, %v1056
    %v1512 = vpack.c.b16 %v1062, %v1057
    %v1513 = vpack.c.b16 %v1068, %v1063
    %v1514 = vpack.c.b16 %v1069, %v1064
    %v1515 = vpack.c.b16 %v1070, %v1065
    %v1516 = vpack.c.b16 %v1071, %v1066
    %v1517 = vpack.c.b16 %v1072, %v1067
    %v1518 = vpack.c.b16 %v1078, %v1073
    %v1519 = vpack.c.b16 %v1079, %v1074
    %v1520 = vpack.c.b16 %v1080, %v1075
    %v1521 = vpack.c.b16 %v1081, %v1076
    %v1522 = vpack.c.b16 %v1082, %v1077
    %v1523 = vpack.c.b16 %v1088, %v1083
    %v1524 = vpack.c.b16 %v1089, %v1084
    %v1525 = vpack.c.b16 %v1090, %v1085
    %v1526 = vpack.c.b16 %v1091, %v1086
    %v1527 = vpack.c.b16 %v1092, %v1087
    %v1528 = vpack.c.b16 %v1098, %v1093
    %v1529 = vpack.c.b16 %v1099, %v1094
    %v1530 = vpack.c.b16 %v1100, %v1095
    %v1531 = vpack.c.b16 %v1101, %v1096
    %v1532 = vpack.c.b16 %v1102, %v1097
    %v1533 = vpack.c.b16 %v1108, %v1103
    %v1534 = vpack.c.b16 %v1109, %v1104
    %v1535 = vpack.c.b16 %v1110, %v1105
    %v1536 = vpack.c.b16 %v1111, %v1106
    %v1537 = vpack.c.b16 %v1112, %v1107
    %v1538 = vpack.c.b16 %v1118, %v1113
    %v1539 = vpack.c.b16 %v1119, %v1114
    %v1540 = vpack.c.b16 %v1120, %v1115
    %v1541 = vpack.c.b16 %v1121, %v1116
    %v1542 = vpack.c.b16 %v1122, %v1117
    %v1543 = vpack.c.b16 %v1128, %v1123
    %v1544 = vpack.c.b16 %v1129, %v1124
    %v1545 = vpack.c.b16 %v1130, %v1125
    %v1546 = vpack.c.b16 %v1131, %v1126
    %v1547 = vpack.c.b16 %v1132, %v1127
    %v1548 = vpack.c.b16 %v1138, %v1133
    %v1549 = vpack.c.b16 %v1139, %v1134
    %v1550 = vpack.c.b16 %v1140, %v1135
    %v1551 = vpack.c.b16 %v1141, %v1136
    %v1552 = vpack.c.b16 %v1142, %v1137
    %v1553 = vpack.c.b16 %v1148, %v1143
    %v1554 = vpack.c.b16 %v1149, %v1144
    %v1555 = vpack.c.b16 %v1150, %v1145
    %v1556 = vpack.c.b16 %v1151, %v1146
    %v1557 = vpack.c.b16 %v1152, %v1147
    %v1558 = vpack.c.b16 %v1158, %v1153
    %v1559 = vpack.c.b16 %v1159, %v1154
    %v1560 = vpack.c.b16 %v1160, %v1155
    %v1561 = vpack.c.b16 %v1161, %v1156
    %v1562 = vpack.c.b16 %v1162, %v1157
    %v1563 = vpack.c.b16 %v1168, %v1163
    %v1564 = vpack.c.b16 %v1169, %v1164
    %v1565 = vpack.c.b16 %v1170, %v1165
    %v1566 = vpack.c.b16 %v1171, %v1166
    %v1567 = vpack.c.b16 %v1172, %v1167
    %v1568 = vpack.c.b16 %v1178, %v1173
    %v1569 = vpack.c.b16 %v1179, %v1174
    %v1570 = vpack.c.b16 %v1180, %v1175
    %v1571 = vpack.c.b16 %v1181, %v1176
    %v1572 = vpack.c.b16 %v1182, %v1177
    %v1573 = vpack.c.b16 %v1188, %v1183
    %v1574 = vpack.c.b16 %v1189, %v1184
    %v1575 = vpack.c.b16 %v1190, %v1185
    %v1576 = vpack.c.b16 %v1191, %v1186
    %v1577 = vpack.c.b16 %v1192, %v1187
    %v1578 = vpack.c.b16 %v1198, %v1193
    %v1579 = vpack.c.b16 %v1199, %v1194
    %v1580 = vpack.c.b16 %v1200, %v1195
    %v1581 = vpack.c.b16 %v1201, %v1196
    %v1582 = vpack.c.b16 %v1202, %v1197
    %v1583 = vpack.c.b16 %v1208, %v1203
    %v1584 = vpack.c.b16 %v1209, %v1204
    %v1585 = vpack.c.b16 %v1210, %v1205
    %v1586 = vpack.c.b16 %v1211, %v1206
    %v1587 = vpack.c.b16 %v1212, %v1207
    %v1588 = vpack.c.b16 %v1218, %v1213
    %v1589 = vpack.c.b16 %v1219, %v1214
    %v1590 = vpack.c.b16 %v1220, %v1215
    %v1591 = vpack.c.b16 %v1221, %v1216
    %v1592 = vpack.c.b16 %v1222, %v1217
    %v1593 = vpack.c.b16 %v1228, %v1223
    %v1594 = vpack.c.b16 %v1229, %v1224
    %v1595 = vpack.c.b16 %v1230, %v1225
    %v1596 = vpack.c.b16 %v1231, %v1226
    %v1597 = vpack.c.b16 %v1232, %v1227
    %v1598 = vpack.c.b16 %v1238, %v1233
    %v1599 = vpack.c.b16 %v1239, %v1234
    %v1600 = vpack.c.b16 %v1240, %v1235
    %v1601 = vpack.c.b16 %v1241, %v1236
    %v1602 = vpack.c.b16 %v1242, %v1237
    %v1603 = vpack.c.b16 %v1248, %v1243
    %v1604 = vpack.c.b16 %v1249, %v1244
    %v1605 = vpack.c.b16 %v1250, %v1245
    %v1606 = vpack.c.b16 %v1251, %v1246
    %v1607 = vpack.c.b16 %v1252, %v1247
    %v1608 = vpack.c.b16 %v1258, %v1253
    %v1609 = vpack.c.b16 %v1259, %v1254
    %v1610 = vpack.c.b16 %v1260, %v1255
    %v1611 = vpack.c.b16 %v1261, %v1256
    %v1612 = vpack.c.b16 %v1262, %v1257
    %v1613 = vpack.c.b16 %v1268, %v1263
    %v1614 = vpack.c.b16 %v1269, %v1264
    %v1615 = vpack.c.b16 %v1270, %v1265
    %v1616 = vpack.c.b16 %v1271, %v1266
    %v1617 = vpack.c.b16 %v1272, %v1267
    %v1618 = vpack.c.b16 %v1278, %v1273
    %v1619 = vpack.c.b16 %v1279, %v1274
    %v1620 = vpack.c.b16 %v1280, %v1275
    %v1621 = vpack.c.b16 %v1281, %v1276
    %v1622 = vpack.c.b16 %v1282, %v1277
    %v1623 = vpack.c.b16 %v1288, %v1283
    %v1624 = vpack.c.b16 %v1289, %v1284
    %v1625 = vpack.c.b16 %v1290, %v1285
    %v1626 = vpack.c.b16 %v1291, %v1286
    %v1627 = vpack.c.b16 %v1292, %v1287
    %v1628 = vpack.c.b16 %v1298, %v1293
    %v1629 = vpack.c.b16 %v1299, %v1294
    %v1630 = vpack.c.b16 %v1300, %v1295
    %v1631 = vpack.c.b16 %v1301, %v1296
    %v1632 = vpack.c.b16 %v1302, %v1297
    %v1633 = vpack.c.b16 %v1308, %v1303
    %v1634 = vpack.c.b16 %v1309, %v1304
    %v1635 = vpack.c.b16 %v1310, %v1305
    %v1636 = vpack.c.b16 %v1311, %v1306
    %v1637 = vpack.c.b16 %v1312, %v1307
    %v1638 = vpack.c.b16 %v1318, %v1313
    %v1639 = vpack.c.b16 %v1319, %v1314
    %v1640 = vpack.c.b16 %v1320, %v1315
    %v1641 = vpack.c.b16 %v1321, %v1316
    %v1642 = vpack.c.b16 %v1322, %v1317
    %v1643 = vpack.c.b16 %v1328, %v1323
    %v1644 = vpack.c.b16 %v1329, %v1324
    %v1645 = vpack.c.b16 %v1330, %v1325
    %v1646 = vpack.c.b16 %v1331, %v1326
    %v1647 = vpack.c.b16 %v1332, %v1327
    %v1648 = vpack.c.b16 %v1338, %v1333
    %v1649 = vpack.c.b16 %v1339, %v1334
    %v1650 = vpack.c.b16 %v1340, %v1335
    %v1651 = vpack.c.b16 %v1341, %v1336
    %v1652 = vpack.c.b16 %v1342, %v1337
    %v1653 = vpack.c.b16 %v1348, %v1343
    %v1654 = vpack.c.b16 %v1349, %v1344
    %v1655 = vpack.c.b16 %v1350, %v1345
    %v1656 = vpack.c.b16 %v1351, %v1346
    %v1657 = vpack.c.b16 %v1352, %v1347
    %v1658 = vpack.c.b16 %v1358, %v1353
    %v1659 = vpack.c.b16 %v1359, %v1354
    %v1660 = vpack.c.b16 %v1360, %v1355
    %v1661 = vpack.c.b16 %v1361, %v1356
    %v1662 = vpack.c.b16 %v1362, %v1357
    %v1663 = vpack.c.b16 %v1368, %v1363
    %v1664 = vpack.c.b16 %v1369, %v1364
    %v1665 = vpack.c.b16 %v1370, %v1365
    %v1666 = vpack.c.b16 %v1371, %v1366
    %v1667 = vpack.c.b16 %v1372, %v1367
    %v1668 = vpack.c.b16 %v1378, %v1373
    %v1669 = vpack.c.b16 %v1379, %v1374
    %v1670 = vpack.c.b16 %v1380, %v1375
    %v1671 = vpack.c.b16 %v1381, %v1376
    %v1672 = vpack.c.b16 %v1382, %v1377
    %v1673 = vpack.c.b16 %v1388, %v1383
    %v1674 = vpack.c.b16 %v1389, %v1384
    %v1675 = vpack.c.b16 %v1390, %v1385
    %v1676 = vpack.c.b16 %v1391, %v1386
    %v1677 = vpack.c.b16 %v1392, %v1387
    %v1678 = vpack.c.b16 %v1398, %v1393
    %v1679 = vpack.c.b16 %v1399, %v1394
    %v1680 = vpack.c.b16 %v1400, %v1395
    %v1681 = vpack.c.b16 %v1401, %v1396
    %v1682 = vpack.c.b16 %v1402, %v1397
    %1963 = vmatprep.subr.bf16.mxu0 %v1404
    %1964 = vmatpush1.bf16.msra.mxu0 %v1403
    %1965 = vmatprep.subr.bf16.mxu0 %v1409
    %1966 = vmatpush1.bf16.msra.mxu0 %v1408
    %1967 = vmatprep.subr.bf16.mxu0 %v1414
    %1968 = vmatpush1.bf16.msra.mxu0 %v1413
    %1969 = vmatprep.subr.bf16.mxu0 %v1419
    %1970 = vmatpush1.bf16.msra.mxu0 %v1418
    %1971 = vmatprep.subr.bf16.mxu0 %v1424
    %1972 = vmatpush1.bf16.msra.mxu0 %v1423
    %1973 = vmatprep.subr.bf16.mxu0 %v1429
    %1974 = vmatpush1.bf16.msra.mxu0 %v1428
    %1975 = vmatprep.subr.bf16.mxu0 %v1434
    %1976 = vmatpush1.bf16.msra.mxu0 %v1433
    %1977 = vmatprep.subr.bf16.mxu0 %v1439
    %1978 = vmatpush1.bf16.msra.mxu0 %v1438
    %1979 = vmatprep.subr.bf16.mxu0 %v1444
    %1980 = vmatpush1.bf16.msra.mxu0 %v1443
    %1981 = vmatprep.subr.bf16.mxu0 %v1449
    %1982 = vmatpush1.bf16.msra.mxu0 %v1448
    %1983 = vmatprep.subr.bf16.mxu0 %v1454
    %1984 = vmatpush1.bf16.msra.mxu0 %v1453
    %1985 = vmatprep.subr.bf16.mxu0 %v1459
    %1986 = vmatpush1.bf16.msra.mxu0 %v1458
    %1987 = vmatprep.subr.bf16.mxu0 %v1464
    %1988 = vmatpush1.bf16.msra.mxu0 %v1463
    %1989 = vmatprep.subr.bf16.mxu0 %v1469
    %1990 = vmatpush1.bf16.msra.mxu0 %v1468
    %1991 = vmatprep.subr.bf16.mxu0 %v1474
    %1992 = vmatpush1.bf16.msra.mxu0 %v1473
    %1993 = vmatprep.subr.bf16.mxu0 %v1479
    %1994 = vmatpush1.bf16.msra.mxu0 %v1478
    %1995 = vmatprep.mubr.bf16.mxu0 %v494
    %1996 = vmatmul.mubr.bf16.gmra.mrb[0].mxu0 %v493
    %v1997 = vpop.f32.mrb[0].mxu0
    %v1998 = vadd.f32 %v460, %v1997
    %v1999 = vpop.f32.mrb[0].mxu0
    %v2000 = vadd.f32 %v464, %v1999
    %v2001 = vpop.f32.mrb[0].mxu0
    %v2002 = vpop.f32.mrb[0].mxu0
    %2003 = vdwg.mxu0
    %2004 = vmatprep.subr.bf16.mxu0 %v1484
    %2005 = vmatpush1.bf16.msra.mxu0 %v1483
    %2006 = vmatprep.subr.bf16.mxu0 %v1489
    %2007 = vmatpush1.bf16.msra.mxu0 %v1488
    %2008 = vmatprep.subr.bf16.mxu0 %v1494
    %2009 = vmatpush1.bf16.msra.mxu0 %v1493
    %2010 = vmatprep.subr.bf16.mxu0 %v1499
    %2011 = vmatpush1.bf16.msra.mxu0 %v1498
    %2012 = vmatprep.subr.bf16.mxu0 %v1504
    %2013 = vmatpush1.bf16.msra.mxu0 %v1503
    %2014 = vmatprep.subr.bf16.mxu0 %v1509
    %2015 = vmatpush1.bf16.msra.mxu0 %v1508
    %2016 = vmatprep.subr.bf16.mxu0 %v1514
    %2017 = vmatpush1.bf16.msra.mxu0 %v1513
    %2018 = vmatprep.subr.bf16.mxu0 %v1519
    %2019 = vmatpush1.bf16.msra.mxu0 %v1518
    %2020 = vmatprep.subr.bf16.mxu0 %v1524
    %2021 = vmatpush1.bf16.msra.mxu0 %v1523
    %2022 = vmatprep.subr.bf16.mxu0 %v1529
    %2023 = vmatpush1.bf16.msra.mxu0 %v1528
    %2024 = vmatprep.subr.bf16.mxu0 %v1534
    %2025 = vmatpush1.bf16.msra.mxu0 %v1533
    %2026 = vmatprep.subr.bf16.mxu0 %v1539
    %2027 = vmatpush1.bf16.msra.mxu0 %v1538
    %2028 = vmatprep.subr.bf16.mxu0 %v1544
    %2029 = vmatpush1.bf16.msra.mxu0 %v1543
    %2030 = vmatprep.subr.bf16.mxu0 %v1549
    %2031 = vmatpush1.bf16.msra.mxu0 %v1548
    %2032 = vmatprep.subr.bf16.mxu0 %v1554
    %2033 = vmatpush1.bf16.msra.mxu0 %v1553
    %2034 = vmatprep.subr.bf16.mxu0 %v1559
    %2035 = vmatpush1.bf16.msra.mxu0 %v1558
    %2036 = vmatprep.mubr.bf16.mxu0 %v496
    %2037 = vmatmul.mubr.bf16.gmra.mrb[0].mxu0 %v495
    %v2038 = vpop.f32.mrb[0].mxu0
    %v2039 = vadd.f32 %v1998, %v2038
    %v2040 = vpop.f32.mrb[0].mxu0
    %v2041 = vadd.f32 %v2000, %v2040
    %v2042 = vpop.f32.mrb[0].mxu0
    %v2043 = vpop.f32.mrb[0].mxu0
    %2044 = vdwg.mxu0
    %2045 = vmatprep.subr.bf16.mxu0 %v1564
    %2046 = vmatpush1.bf16.msra.mxu0 %v1563
    %2047 = vmatprep.subr.bf16.mxu0 %v1569
    %2048 = vmatpush1.bf16.msra.mxu0 %v1568
    %2049 = vmatprep.subr.bf16.mxu0 %v1574
    %2050 = vmatpush1.bf16.msra.mxu0 %v1573
    %2051 = vmatprep.subr.bf16.mxu0 %v1579
    %2052 = vmatpush1.bf16.msra.mxu0 %v1578
    %2053 = vmatprep.subr.bf16.mxu0 %v1584
    %2054 = vmatpush1.bf16.msra.mxu0 %v1583
    %2055 = vmatprep.subr.bf16.mxu0 %v1589
    %2056 = vmatpush1.bf16.msra.mxu0 %v1588
    %2057 = vmatprep.subr.bf16.mxu0 %v1594
    %2058 = vmatpush1.bf16.msra.mxu0 %v1593
    %2059 = vmatprep.subr.bf16.mxu0 %v1599
    %2060 = vmatpush1.bf16.msra.mxu0 %v1598
    %2061 = vmatprep.subr.bf16.mxu0 %v1604
    %2062 = vmatpush1.bf16.msra.mxu0 %v1603
    %2063 = vmatprep.subr.bf16.mxu0 %v1609
    %2064 = vmatpush1.bf16.msra.mxu0 %v1608
    %2065 = vmatprep.subr.bf16.mxu0 %v1614
    %2066 = vmatpush1.bf16.msra.mxu0 %v1613
    %2067 = vmatprep.subr.bf16.mxu0 %v1619
    %2068 = vmatpush1.bf16.msra.mxu0 %v1618
    %2069 = vmatprep.subr.bf16.mxu0 %v1624
    %2070 = vmatpush1.bf16.msra.mxu0 %v1623
    %2071 = vmatprep.subr.bf16.mxu0 %v1629
    %2072 = vmatpush1.bf16.msra.mxu0 %v1628
    %2073 = vmatprep.subr.bf16.mxu0 %v1634
    %2074 = vmatpush1.bf16.msra.mxu0 %v1633
    %2075 = vmatprep.subr.bf16.mxu0 %v1639
    %2076 = vmatpush1.bf16.msra.mxu0 %v1638
    %2077 = vmatprep.mubr.bf16.mxu0 %v498
    %2078 = vmatmul.mubr.bf16.gmra.mrb[0].mxu0 %v497
    %v2079 = vpop.f32.mrb[0].mxu0
    %v2080 = vadd.f32 %v2039, %v2079
    %v2081 = vpop.f32.mrb[0].mxu0
    %v2082 = vadd.f32 %v2041, %v2081
    %v2083 = vpop.f32.mrb[0].mxu0
    %v2084 = vpop.f32.mrb[0].mxu0
    %2085 = vdwg.mxu0
    %2086 = vmatprep.subr.bf16.mxu0 %v1644
    %2087 = vmatpush1.bf16.msra.mxu0 %v1643
    %2088 = vmatprep.subr.bf16.mxu0 %v1649
    %2089 = vmatpush1.bf16.msra.mxu0 %v1648
    %2090 = vmatprep.subr.bf16.mxu0 %v1654
    %2091 = vmatpush1.bf16.msra.mxu0 %v1653
    %2092 = vmatprep.subr.bf16.mxu0 %v1659
    %2093 = vmatpush1.bf16.msra.mxu0 %v1658
    %2094 = vmatprep.subr.bf16.mxu0 %v1664
    %2095 = vmatpush1.bf16.msra.mxu0 %v1663
    %2096 = vmatprep.subr.bf16.mxu0 %v1669
    %2097 = vmatpush1.bf16.msra.mxu0 %v1668
    %2098 = vmatprep.subr.bf16.mxu0 %v1674
    %2099 = vmatpush1.bf16.msra.mxu0 %v1673
    %2100 = vmatprep.subr.bf16.mxu0 %v1679
    %2101 = vmatpush1.bf16.msra.mxu0 %v1678
    %2102 = vmatprep.subr.bf16.mxu0 0
    %2103 = vmatpush1.bf16.msra.mxu0 0
    %2104 = vmatprep.subr.bf16.mxu0 0
    %2105 = vmatpush1.bf16.msra.mxu0 0
    %2106 = vmatprep.subr.bf16.mxu0 0
    %2107 = vmatpush1.bf16.msra.mxu0 0
    %2108 = vmatprep.subr.bf16.mxu0 0
    %2109 = vmatpush1.bf16.msra.mxu0 0
    %2110 = vmatprep.subr.bf16.mxu0 0
    %2111 = vmatpush1.bf16.msra.mxu0 0
    %2112 = vmatprep.subr.bf16.mxu0 0
    %2113 = vmatpush1.bf16.msra.mxu0 0
    %2114 = vmatprep.subr.bf16.mxu0 0
    %2115 = vmatpush1.bf16.msra.mxu0 0
    %2116 = vmatprep.subr.bf16.mxu0 0
    %2117 = vmatpush1.bf16.msra.mxu0 0
    %2118 = vmatprep.mubr.bf16.mxu0 0
    %2119 = vmatmul.mubr.bf16.gmra.mrb[0].mxu0 %v499
    %v2120 = vpop.f32.mrb[0].mxu0
    %v2121 = vadd.f32 %v2080, %v2120
    %v2122 = vpop.f32.mrb[0].mxu0
    %v2123 = vadd.f32 %v2082, %v2122
    %v2124 = vpop.f32.mrb[0].mxu0
    %v2125 = vpop.f32.mrb[0].mxu0
    %2126 = vdwg.mxu0
    %2127 = vmatprep.subr.bf16.mxu0 %v1406
    %2128 = vmatpush1.bf16.msra.mxu0 %v1405
    %2129 = vmatprep.subr.bf16.mxu0 %v1411
    %2130 = vmatpush1.bf16.msra.mxu0 %v1410
    %2131 = vmatprep.subr.bf16.mxu0 %v1416
    %2132 = vmatpush1.bf16.msra.mxu0 %v1415
    %2133 = vmatprep.subr.bf16.mxu0 %v1421
    %2134 = vmatpush1.bf16.msra.mxu0 %v1420
    %2135 = vmatprep.subr.bf16.mxu0 %v1426
    %2136 = vmatpush1.bf16.msra.mxu0 %v1425
    %2137 = vmatprep.subr.bf16.mxu0 %v1431
    %2138 = vmatpush1.bf16.msra.mxu0 %v1430
    %2139 = vmatprep.subr.bf16.mxu0 %v1436
    %2140 = vmatpush1.bf16.msra.mxu0 %v1435
    %2141 = vmatprep.subr.bf16.mxu0 %v1441
    %2142 = vmatpush1.bf16.msra.mxu0 %v1440
    %2143 = vmatprep.subr.bf16.mxu0 %v1446
    %2144 = vmatpush1.bf16.msra.mxu0 %v1445
    %2145 = vmatprep.subr.bf16.mxu0 %v1451
    %2146 = vmatpush1.bf16.msra.mxu0 %v1450
    %2147 = vmatprep.subr.bf16.mxu0 %v1456
    %2148 = vmatpush1.bf16.msra.mxu0 %v1455
    %2149 = vmatprep.subr.bf16.mxu0 %v1461
    %2150 = vmatpush1.bf16.msra.mxu0 %v1460
    %2151 = vmatprep.subr.bf16.mxu0 %v1466
    %2152 = vmatpush1.bf16.msra.mxu0 %v1465
    %2153 = vmatprep.subr.bf16.mxu0 %v1471
    %2154 = vmatpush1.bf16.msra.mxu0 %v1470
    %2155 = vmatprep.subr.bf16.mxu0 %v1476
    %2156 = vmatpush1.bf16.msra.mxu0 %v1475
    %2157 = vmatprep.subr.bf16.mxu0 %v1481
    %2158 = vmatpush1.bf16.msra.mxu0 %v1480
    %2159 = vmatprep.mubr.bf16.mxu0 %v494
    %2160 = vmatmul.mubr.bf16.gmra.mrb[0].mxu0 %v493
    %v2161 = vpop.f32.mrb[0].mxu0
    %v2162 = vadd.f32 %v468, %v2161
    %v2163 = vpop.f32.mrb[0].mxu0
    %v2164 = vadd.f32 %v472, %v2163
    %v2165 = vpop.f32.mrb[0].mxu0
    %v2166 = vpop.f32.mrb[0].mxu0
    %2167 = vdwg.mxu0
    %2168 = vmatprep.subr.bf16.mxu0 %v1486
    %2169 = vmatpush1.bf16.msra.mxu0 %v1485
    %2170 = vmatprep.subr.bf16.mxu0 %v1491
    %2171 = vmatpush1.bf16.msra.mxu0 %v1490
    %2172 = vmatprep.subr.bf16.mxu0 %v1496
    %2173 = vmatpush1.bf16.msra.mxu0 %v1495
    %2174 = vmatprep.subr.bf16.mxu0 %v1501
    %2175 = vmatpush1.bf16.msra.mxu0 %v1500
    %2176 = vmatprep.subr.bf16.mxu0 %v1506
    %2177 = vmatpush1.bf16.msra.mxu0 %v1505
    %2178 = vmatprep.subr.bf16.mxu0 %v1511
    %2179 = vmatpush1.bf16.msra.mxu0 %v1510
    %2180 = vmatprep.subr.bf16.mxu0 %v1516
    %2181 = vmatpush1.bf16.msra.mxu0 %v1515
    %2182 = vmatprep.subr.bf16.mxu0 %v1521
    %2183 = vmatpush1.bf16.msra.mxu0 %v1520
    %2184 = vmatprep.subr.bf16.mxu0 %v1526
    %2185 = vmatpush1.bf16.msra.mxu0 %v1525
    %2186 = vmatprep.subr.bf16.mxu0 %v1531
    %2187 = vmatpush1.bf16.msra.mxu0 %v1530
    %2188 = vmatprep.subr.bf16.mxu0 %v1536
    %2189 = vmatpush1.bf16.msra.mxu0 %v1535
    %2190 = vmatprep.subr.bf16.mxu0 %v1541
    %2191 = vmatpush1.bf16.msra.mxu0 %v1540
    %2192 = vmatprep.subr.bf16.mxu0 %v1546
    %2193 = vmatpush1.bf16.msra.mxu0 %v1545
    %2194 = vmatprep.subr.bf16.mxu0 %v1551
    %2195 = vmatpush1.bf16.msra.mxu0 %v1550
    %2196 = vmatprep.subr.bf16.mxu0 %v1556
    %2197 = vmatpush1.bf16.msra.mxu0 %v1555
    %2198 = vmatprep.subr.bf16.mxu0 %v1561
    %2199 = vmatpush1.bf16.msra.mxu0 %v1560
    %2200 = vmatprep.mubr.bf16.mxu0 %v496
    %2201 = vmatmul.mubr.bf16.gmra.mrb[0].mxu0 %v495
    %v2202 = vpop.f32.mrb[0].mxu0
    %v2203 = vadd.f32 %v2162, %v2202
    %v2204 = vpop.f32.mrb[0].mxu0
    %v2205 = vadd.f32 %v2164, %v2204
    %v2206 = vpop.f32.mrb[0].mxu0
    %v2207 = vpop.f32.mrb[0].mxu0
    %2208 = vdwg.mxu0
    %2209 = vmatprep.subr.bf16.mxu0 %v1566
    %2210 = vmatpush1.bf16.msra.mxu0 %v1565
    %2211 = vmatprep.subr.bf16.mxu0 %v1571
    %2212 = vmatpush1.bf16.msra.mxu0 %v1570
    %2213 = vmatprep.subr.bf16.mxu0 %v1576
    %2214 = vmatpush1.bf16.msra.mxu0 %v1575
    %2215 = vmatprep.subr.bf16.mxu0 %v1581
    %2216 = vmatpush1.bf16.msra.mxu0 %v1580
    %2217 = vmatprep.subr.bf16.mxu0 %v1586
    %2218 = vmatpush1.bf16.msra.mxu0 %v1585
    %2219 = vmatprep.subr.bf16.mxu0 %v1591
    %2220 = vmatpush1.bf16.msra.mxu0 %v1590
    %2221 = vmatprep.subr.bf16.mxu0 %v1596
    %2222 = vmatpush1.bf16.msra.mxu0 %v1595
    %2223 = vmatprep.subr.bf16.mxu0 %v1601
    %2224 = vmatpush1.bf16.msra.mxu0 %v1600
    %2225 = vmatprep.subr.bf16.mxu0 %v1606
    %2226 = vmatpush1.bf16.msra.mxu0 %v1605
    %2227 = vmatprep.subr.bf16.mxu0 %v1611
    %2228 = vmatpush1.bf16.msra.mxu0 %v1610
    %2229 = vmatprep.subr.bf16.mxu0 %v1616
    %2230 = vmatpush1.bf16.msra.mxu0 %v1615
    %2231 = vmatprep.subr.bf16.mxu0 %v1621
    %2232 = vmatpush1.bf16.msra.mxu0 %v1620
    %2233 = vmatprep.subr.bf16.mxu0 %v1626
    %2234 = vmatpush1.bf16.msra.mxu0 %v1625
    %2235 = vmatprep.subr.bf16.mxu0 %v1631
    %2236 = vmatpush1.bf16.msra.mxu0 %v1630
    %2237 = vmatprep.subr.bf16.mxu0 %v1636
    %2238 = vmatpush1.bf16.msra.mxu0 %v1635
    %2239 = vmatprep.subr.bf16.mxu0 %v1641
    %2240 = vmatpush1.bf16.msra.mxu0 %v1640
    %2241 = vmatprep.mubr.bf16.mxu0 %v498
    %2242 = vmatmul.mubr.bf16.gmra.mrb[0].mxu0 %v497
    %v2243 = vpop.f32.mrb[0].mxu0
    %v2244 = vadd.f32 %v2203, %v2243
    %v2245 = vpop.f32.mrb[0].mxu0
    %v2246 = vadd.f32 %v2205, %v2245
    %v2247 = vpop.f32.mrb[0].mxu0
    %v2248 = vpop.f32.mrb[0].mxu0
    %2249 = vdwg.mxu0
    %2250 = vmatprep.subr.bf16.mxu0 %v1646
    %2251 = vmatpush1.bf16.msra.mxu0 %v1645
    %2252 = vmatprep.subr.bf16.mxu0 %v1651
    %2253 = vmatpush1.bf16.msra.mxu0 %v1650
    %2254 = vmatprep.subr.bf16.mxu0 %v1656
    %2255 = vmatpush1.bf16.msra.mxu0 %v1655
    %2256 = vmatprep.subr.bf16.mxu0 %v1661
    %2257 = vmatpush1.bf16.msra.mxu0 %v1660
    %2258 = vmatprep.subr.bf16.mxu0 %v1666
    %2259 = vmatpush1.bf16.msra.mxu0 %v1665
    %2260 = vmatprep.subr.bf16.mxu0 %v1671
    %2261 = vmatpush1.bf16.msra.mxu0 %v1670
    %2262 = vmatprep.subr.bf16.mxu0 %v1676
    %2263 = vmatpush1.bf16.msra.mxu0 %v1675
    %2264 = vmatprep.subr.bf16.mxu0 %v1681
    %2265 = vmatpush1.bf16.msra.mxu0 %v1680
    %2266 = vmatprep.subr.bf16.mxu0 0
    %2267 = vmatpush1.bf16.msra.mxu0 0
    %2268 = vmatprep.subr.bf16.mxu0 0
    %2269 = vmatpush1.bf16.msra.mxu0 0
    %2270 = vmatprep.subr.bf16.mxu0 0
    %2271 = vmatpush1.bf16.msra.mxu0 0
    %2272 = vmatprep.subr.bf16.mxu0 0
    %2273 = vmatpush1.bf16.msra.mxu0 0
    %2274 = vmatprep.subr.bf16.mxu0 0
    %2275 = vmatpush1.bf16.msra.mxu0 0
    %2276 = vmatprep.subr.bf16.mxu0 0
    %2277 = vmatpush1.bf16.msra.mxu0 0
    %2278 = vmatprep.subr.bf16.mxu0 0
    %2279 = vmatpush1.bf16.msra.mxu0 0
    %2280 = vmatprep.subr.bf16.mxu0 0
    %2281 = vmatpush1.bf16.msra.mxu0 0
    %2282 = vmatprep.mubr.bf16.mxu0 0
    %2283 = vmatmul.mubr.bf16.gmra.mrb[0].mxu0 %v499
    %v2284 = vpop.f32.mrb[0].mxu0
    %v2285 = vadd.f32 %v2244, %v2284
    %v2286 = vpop.f32.mrb[0].mxu0
    %v2287 = vadd.f32 %v2246, %v2286
    %v2288 = vpop.f32.mrb[0].mxu0
    %v2289 = vpop.f32.mrb[0].mxu0
    %2290 = vdwg.mxu0
    %2291 = vmatprep.subr.bf16.mxu0 0
    %2292 = vmatpush1.bf16.msra.mxu0 %v1407
    %2293 = vmatprep.subr.bf16.mxu0 0
    %2294 = vmatpush1.bf16.msra.mxu0 %v1412
    %2295 = vmatprep.subr.bf16.mxu0 0
    %2296 = vmatpush1.bf16.msra.mxu0 %v1417
    %2297 = vmatprep.subr.bf16.mxu0 0
    %2298 = vmatpush1.bf16.msra.mxu0 %v1422
    %2299 = vmatprep.subr.bf16.mxu0 0
    %2300 = vmatpush1.bf16.msra.mxu0 %v1427
    %2301 = vmatprep.subr.bf16.mxu0 0
    %2302 = vmatpush1.bf16.msra.mxu0 %v1432
    %2303 = vmatprep.subr.bf16.mxu0 0
    %2304 = vmatpush1.bf16.msra.mxu0 %v1437
    %2305 = vmatprep.subr.bf16.mxu0 0
    %2306 = vmatpush1.bf16.msra.mxu0 %v1442
    %2307 = vmatprep.subr.bf16.mxu0 0
    %2308 = vmatpush1.bf16.msra.mxu0 %v1447
    %2309 = vmatprep.subr.bf16.mxu0 0
    %2310 = vmatpush1.bf16.msra.mxu0 %v1452
    %2311 = vmatprep.subr.bf16.mxu0 0
    %2312 = vmatpush1.bf16.msra.mxu0 %v1457
    %2313 = vmatprep.subr.bf16.mxu0 0
    %2314 = vmatpush1.bf16.msra.mxu0 %v1462
    %2315 = vmatprep.subr.bf16.mxu0 0
    %2316 = vmatpush1.bf16.msra.mxu0 %v1467
    %2317 = vmatprep.subr.bf16.mxu0 0
    %2318 = vmatpush1.bf16.msra.mxu0 %v1472
    %2319 = vmatprep.subr.bf16.mxu0 0
    %2320 = vmatpush1.bf16.msra.mxu0 %v1477
    %2321 = vmatprep.subr.bf16.mxu0 0
    %2322 = vmatpush1.bf16.msra.mxu0 %v1482
    %2323 = vmatprep.mubr.bf16.mxu0 %v494
    %2324 = vmatmul.mubr.bf16.gmra.mrb[0].mxu0 %v493
    %v2325 = vpop.f32.mrb[0].mxu0
    %v2326 = vadd.f32 %v476, %v2325
    %v2327 = vpop.f32.mrb[0].mxu0
    %v2328 = vpop.f32.mrb[0].mxu0
    %v2329 = vpop.f32.mrb[0].mxu0
    %2330 = vdwg.mxu0
    %2331 = vmatprep.subr.bf16.mxu0 0
    %2332 = vmatpush1.bf16.msra.mxu0 %v1487
    %2333 = vmatprep.subr.bf16.mxu0 0
    %2334 = vmatpush1.bf16.msra.mxu0 %v1492
    %2335 = vmatprep.subr.bf16.mxu0 0
    %2336 = vmatpush1.bf16.msra.mxu0 %v1497
    %2337 = vmatprep.subr.bf16.mxu0 0
    %2338 = vmatpush1.bf16.msra.mxu0 %v1502
    %2339 = vmatprep.subr.bf16.mxu0 0
    %2340 = vmatpush1.bf16.msra.mxu0 %v1507
    %2341 = vmatprep.subr.bf16.mxu0 0
    %2342 = vmatpush1.bf16.msra.mxu0 %v1512
    %2343 = vmatprep.subr.bf16.mxu0 0
    %2344 = vmatpush1.bf16.msra.mxu0 %v1517
    %2345 = vmatprep.subr.bf16.mxu0 0
    %2346 = vmatpush1.bf16.msra.mxu0 %v1522
    %2347 = vmatprep.subr.bf16.mxu0 0
    %2348 = vmatpush1.bf16.msra.mxu0 %v1527
    %2349 = vmatprep.subr.bf16.mxu0 0
    %2350 = vmatpush1.bf16.msra.mxu0 %v1532
    %2351 = vmatprep.subr.bf16.mxu0 0
    %2352 = vmatpush1.bf16.msra.mxu0 %v1537
    %2353 = vmatprep.subr.bf16.mxu0 0
    %2354 = vmatpush1.bf16.msra.mxu0 %v1542
    %2355 = vmatprep.subr.bf16.mxu0 0
    %2356 = vmatpush1.bf16.msra.mxu0 %v1547
    %2357 = vmatprep.subr.bf16.mxu0 0
    %2358 = vmatpush1.bf16.msra.mxu0 %v1552
    %2359 = vmatprep.subr.bf16.mxu0 0
    %2360 = vmatpush1.bf16.msra.mxu0 %v1557
    %2361 = vmatprep.subr.bf16.mxu0 0
    %2362 = vmatpush1.bf16.msra.mxu0 %v1562
    %2363 = vmatprep.mubr.bf16.mxu0 %v496
    %2364 = vmatmul.mubr.bf16.gmra.mrb[0].mxu0 %v495
    %v2365 = vpop.f32.mrb[0].mxu0
    %v2366 = vadd.f32 %v2326, %v2365
    %v2367 = vpop.f32.mrb[0].mxu0
    %v2368 = vpop.f32.mrb[0].mxu0
    %v2369 = vpop.f32.mrb[0].mxu0
    %2370 = vdwg.mxu0
    %2371 = vmatprep.subr.bf16.mxu0 0
    %2372 = vmatpush1.bf16.msra.mxu0 %v1567
    %2373 = vmatprep.subr.bf16.mxu0 0
    %2374 = vmatpush1.bf16.msra.mxu0 %v1572
    %2375 = vmatprep.subr.bf16.mxu0 0
    %2376 = vmatpush1.bf16.msra.mxu0 %v1577
    %2377 = vmatprep.subr.bf16.mxu0 0
    %2378 = vmatpush1.bf16.msra.mxu0 %v1582
    %2379 = vmatprep.subr.bf16.mxu0 0
    %2380 = vmatpush1.bf16.msra.mxu0 %v1587
    %2381 = vmatprep.subr.bf16.mxu0 0
    %2382 = vmatpush1.bf16.msra.mxu0 %v1592
    %2383 = vmatprep.subr.bf16.mxu0 0
    %2384 = vmatpush1.bf16.msra.mxu0 %v1597
    %2385 = vmatprep.subr.bf16.mxu0 0
    %2386 = vmatpush1.bf16.msra.mxu0 %v1602
    %2387 = vmatprep.subr.bf16.mxu0 0
    %2388 = vmatpush1.bf16.msra.mxu0 %v1607
    %2389 = vmatprep.subr.bf16.mxu0 0
    %2390 = vmatpush1.bf16.msra.mxu0 %v1612
    %2391 = vmatprep.subr.bf16.mxu0 0
    %2392 = vmatpush1.bf16.msra.mxu0 %v1617
    %2393 = vmatprep.subr.bf16.mxu0 0
    %2394 = vmatpush1.bf16.msra.mxu0 %v1622
    %2395 = vmatprep.subr.bf16.mxu0 0
    %2396 = vmatpush1.bf16.msra.mxu0 %v1627
    %2397 = vmatprep.subr.bf16.mxu0 0
    %2398 = vmatpush1.bf16.msra.mxu0 %v1632
    %2399 = vmatprep.subr.bf16.mxu0 0
    %2400 = vmatpush1.bf16.msra.mxu0 %v1637
    %2401 = vmatprep.subr.bf16.mxu0 0
    %2402 = vmatpush1.bf16.msra.mxu0 %v1642
    %2403 = vmatprep.mubr.bf16.mxu0 %v498
    %2404 = vmatmul.mubr.bf16.gmra.mrb[0].mxu0 %v497
    %v2405 = vpop.f32.mrb[0].mxu0
    %v2406 = vadd.f32 %v2366, %v2405
    %v2407 = vpop.f32.mrb[0].mxu0
    %v2408 = vpop.f32.mrb[0].mxu0
    %v2409 = vpop.f32.mrb[0].mxu0
    %2410 = vdwg.mxu0
    %2411 = vmatprep.subr.bf16.mxu0 0
    %2412 = vmatpush1.bf16.msra.mxu0 %v1647
    %2413 = vmatprep.subr.bf16.mxu0 0
    %2414 = vmatpush1.bf16.msra.mxu0 %v1652
    %2415 = vmatprep.subr.bf16.mxu0 0
    %2416 = vmatpush1.bf16.msra.mxu0 %v1657
    %2417 = vmatprep.subr.bf16.mxu0 0
    %2418 = vmatpush1.bf16.msra.mxu0 %v1662
    %2419 = vmatprep.subr.bf16.mxu0 0
    %2420 = vmatpush1.bf16.msra.mxu0 %v1667
    %2421 = vmatprep.subr.bf16.mxu0 0
    %2422 = vmatpush1.bf16.msra.mxu0 %v1672
    %2423 = vmatprep.subr.bf16.mxu0 0
    %2424 = vmatpush1.bf16.msra.mxu0 %v1677
    %2425 = vmatprep.subr.bf16.mxu0 0
    %2426 = vmatpush1.bf16.msra.mxu0 %v1682
    %2427 = vmatprep.subr.bf16.mxu0 0
    %2428 = vmatpush1.bf16.msra.mxu0 0
    %2429 = vmatprep.subr.bf16.mxu0 0
    %2430 = vmatpush1.bf16.msra.mxu0 0
    %2431 = vmatprep.subr.bf16.mxu0 0
    %2432 = vmatpush1.bf16.msra.mxu0 0
    %2433 = vmatprep.subr.bf16.mxu0 0
    %2434 = vmatpush1.bf16.msra.mxu0 0
    %2435 = vmatprep.subr.bf16.mxu0 0
    %2436 = vmatpush1.bf16.msra.mxu0 0
    %2437 = vmatprep.subr.bf16.mxu0 0
    %2438 = vmatpush1.bf16.msra.mxu0 0
    %2439 = vmatprep.subr.bf16.mxu0 0
    %2440 = vmatpush1.bf16.msra.mxu0 0
    %2441 = vmatprep.subr.bf16.mxu0 0
    %2442 = vmatpush1.bf16.msra.mxu0 0
    %2443 = vmatprep.mubr.bf16.mxu0 0
    %2444 = vmatmul.mubr.bf16.gmra.mrb[0].mxu0 %v499
    %v2445 = vpop.f32.mrb[0].mxu0
    %v2446 = vadd.f32 %v2406, %v2445
    %v2447 = vpop.f32.mrb[0].mxu0
    %v2448 = vpop.f32.mrb[0].mxu0
    %v2449 = vpop.f32.mrb[0].mxu0
    %2450 = vdwg.mxu0
    %v2451 = vmax.f32 %v2121, 0.0
    %v2452 = vmax.f32 %v2123, 0.0
    %v2453 = vmax.f32 %v2285, 0.0
    %v2454 = vmax.f32 %v2287, 0.0
    %v2455 = vmax.f32 %v2446, 0.0
    %v2456 = vpack.c.bf16 %v2451, %v2451
    %v2457 = vpack.c.bf16 %v2452, %v2452
    %v2458 = vpack.c.bf16 %v2453, %v2453
    %v2459 = vpack.c.bf16 %v2454, %v2454
    %v2460 = vpack.c.bf16 %v2455, %v2455
    %v2461 = vld [vmem:[#allocation8] sm:$0xf]
    %v2462 = vld [vmem:[#allocation8 + $0x4] sm:$0xf]
    %v2463 = vld [vmem:[#allocation8 + $0x8] sm:$0xf]
    %v2464 = vld [vmem:[#allocation8 + $0xc] sm:$0xf]
    %v2465 = vld [vmem:[#allocation8 + $0x10] sm:$0xf]
    %v2466 = vld [vmem:[#allocation8 + $0x14] sm:$0xf]
    %v2467 = vld [vmem:[#allocation8 + $0x18] sm:$0xf]
    %v2468 = vld [vmem:[#allocation8 + $0x1c] sm:$0xf]
    %v2469 = vld [vmem:[#allocation8 + $0x20] sm:$0xf]
    %v2470 = vld [vmem:[#allocation8 + $0x24] sm:$0xf]
    %v2471 = vld [vmem:[#allocation8 + $0x28] sm:$0xf]
    %v2472 = vld [vmem:[#allocation8 + $0x2c] sm:$0xf]
    %v2473 = vld [vmem:[#allocation8 + $0x30] sm:$0xf]
    %v2474 = vld [vmem:[#allocation8 + $0x34] sm:$0xf]
    %v2475 = vld [vmem:[#allocation8 + $0x38] sm:$0xf]
    %v2476 = vld [vmem:[#allocation8 + $0x3c] sm:$0xf]
    %v2477 = vld [vmem:[#allocation8 + $0x40] sm:$0xf]
    %v2478 = vld [vmem:[#allocation8 + $0x44] sm:$0xf]
    %v2479 = vld [vmem:[#allocation8 + $0x48] sm:$0xf]
    %v2480 = vld [vmem:[#allocation8 + $0x4c] sm:$0xf]
    %v2481 = vld [vmem:[#allocation8 + $0x50] sm:$0xf]
    %v2482 = vld [vmem:[#allocation8 + $0x54] sm:$0xf]
    %v2483 = vld [vmem:[#allocation8 + $0x58] sm:$0xf]
    %v2484 = vld [vmem:[#allocation8 + $0x5c] sm:$0xf]
    %v2485 = vld [vmem:[#allocation8 + $0x60] sm:$0xf]
    %v2486 = vld [vmem:[#allocation8 + $0x64] sm:$0xf]
    %v2487 = vld [vmem:[#allocation8 + $0x68] sm:$0xf]
    %v2488 = vld [vmem:[#allocation8 + $0x6c] sm:$0xf]
    %v2489 = vld [vmem:[#allocation8 + $0x70] sm:$0xf]
    %v2490 = vld [vmem:[#allocation8 + $0x74] sm:$0xf]
    %v2491 = vld [vmem:[#allocation8 + $0x78] sm:$0xf]
    %v2492 = vld [vmem:[#allocation8 + $0x7c] sm:$0xf]
    %v2493 = vld [vmem:[#allocation8 + $0x80] sm:$0xf]
    %v2494 = vld [vmem:[#allocation8 + $0x84] sm:$0xf]
    %v2495 = vld [vmem:[#allocation8 + $0x88] sm:$0xf]
    %v2496 = vld [vmem:[#allocation8 + $0x8c] sm:$0xf]
    %v2497 = vld [vmem:[#allocation8 + $0x90] sm:$0xf]
    %v2498 = vld [vmem:[#allocation8 + $0x94] sm:$0xf]
    %v2499 = vld [vmem:[#allocation8 + $0x98] sm:$0xf]
    %v2500 = vld [vmem:[#allocation8 + $0x9c] sm:$0xf]
    %v2501 = vld [vmem:[#allocation8 + $0xa0] sm:$0xf]
    %v2502 = vld [vmem:[#allocation8 + $0xa4] sm:$0xf]
    %v2503 = vld [vmem:[#allocation8 + $0xa8] sm:$0xf]
    %v2504 = vld [vmem:[#allocation8 + $0xac] sm:$0xf]
    %v2505 = vld [vmem:[#allocation8 + $0xb0] sm:$0xf]
    %v2506 = vld [vmem:[#allocation8 + $0xb4] sm:$0xf]
    %v2507 = vld [vmem:[#allocation8 + $0xb8] sm:$0xf]
    %v2508 = vld [vmem:[#allocation8 + $0xbc] sm:$0xf]
    %v2509 = vld [vmem:[#allocation8 + $0xc0] sm:$0xf]
    %v2510 = vld [vmem:[#allocation8 + $0xc4] sm:$0xf]
    %v2511 = vld [vmem:[#allocation8 + $0xc8] sm:$0xf]
    %v2512 = vld [vmem:[#allocation8 + $0xcc] sm:$0xf]
    %v2513 = vld [vmem:[#allocation8 + $0xd0] sm:$0xf]
    %v2514 = vld [vmem:[#allocation8 + $0xd4] sm:$0xf]
    %v2515 = vld [vmem:[#allocation8 + $0xd8] sm:$0xf]
    %v2516 = vld [vmem:[#allocation8 + $0xdc] sm:$0xf]
    %v2517 = vld [vmem:[#allocation8 + $0xe0] sm:$0xf]
    %v2518 = vld [vmem:[#allocation8 + $0xe4] sm:$0xf]
    %v2519 = vld [vmem:[#allocation8 + $0xe8] sm:$0xf]
    %v2520 = vld [vmem:[#allocation8 + $0xec] sm:$0xf]
    %v2521 = vld [vmem:[#allocation8 + $0xf0] sm:$0xf]
    %v2522 = vld [vmem:[#allocation8 + $0xf4] sm:$0xf]
    %v2523 = vld [vmem:[#allocation8 + $0xf8] sm:$0xf]
    %v2524 = vld [vmem:[#allocation8 + $0xfc] sm:$0xf]
    %v2525 = vld [vmem:[#allocation8 + $0x100] sm:$0xf]
    %v2526 = vld [vmem:[#allocation8 + $0x104] sm:$0xf]
    %v2527 = vld [vmem:[#allocation8 + $0x108] sm:$0xf]
    %v2528 = vld [vmem:[#allocation8 + $0x10c] sm:$0xf]
    %v2529 = vld [vmem:[#allocation8 + $0x110] sm:$0xf]
    %v2530 = vld [vmem:[#allocation8 + $0x114] sm:$0xf]
    %v2531 = vld [vmem:[#allocation8 + $0x118] sm:$0xf]
    %v2532 = vld [vmem:[#allocation8 + $0x11c] sm:$0xf]
    %v2533 = vld [vmem:[#allocation8 + $0x120] sm:$0xf]
    %v2534 = vld [vmem:[#allocation8 + $0x124] sm:$0xf]
    %v2535 = vld [vmem:[#allocation8 + $0x128] sm:$0xf]
    %v2536 = vld [vmem:[#allocation8 + $0x12c] sm:$0xf]
    %v2537 = vld [vmem:[#allocation8 + $0x130] sm:$0xf]
    %v2538 = vld [vmem:[#allocation8 + $0x134] sm:$0xf]
    %v2539 = vld [vmem:[#allocation8 + $0x138] sm:$0xf]
    %v2540 = vld [vmem:[#allocation8 + $0x13c] sm:$0xf]
    %v2541 = vld [vmem:[#allocation10] sm:$0x1]
    %v2543 = vlaneseq
    %v2544 = vshrl.u32 %v2543, 7
    %v2545 = vsub.s32 0, %v2544
    %v2546 = vrot.slane %v2541, %v2545
    %v2628 = vunpack.c.l.b16 %v2461
    %v2629 = vunpack.c.l.b16 %v2462
    %v2630 = vunpack.c.l.b16 %v2463
    %v2631 = vunpack.c.l.b16 %v2464
    %v2632 = vunpack.c.l.b16 %v2465
    %v2633 = vunpack.c.l.b16 %v2466
    %v2634 = vunpack.c.l.b16 %v2467
    %v2635 = vunpack.c.l.b16 %v2468
    %v2636 = vunpack.c.l.b16 %v2469
    %v2637 = vunpack.c.l.b16 %v2470
    %v2638 = vunpack.c.l.b16 %v2471
    %v2639 = vunpack.c.l.b16 %v2472
    %v2640 = vunpack.c.l.b16 %v2473
    %v2641 = vunpack.c.l.b16 %v2474
    %v2642 = vunpack.c.l.b16 %v2475
    %v2643 = vunpack.c.l.b16 %v2476
    %v2644 = vunpack.c.l.b16 %v2477
    %v2645 = vunpack.c.l.b16 %v2478
    %v2646 = vunpack.c.l.b16 %v2479
    %v2647 = vunpack.c.l.b16 %v2480
    %v2648 = vunpack.c.l.b16 %v2481
    %v2649 = vunpack.c.l.b16 %v2482
    %v2650 = vunpack.c.l.b16 %v2483
    %v2651 = vunpack.c.l.b16 %v2484
    %v2652 = vunpack.c.l.b16 %v2485
    %v2653 = vunpack.c.l.b16 %v2486
    %v2654 = vunpack.c.l.b16 %v2487
    %v2655 = vunpack.c.l.b16 %v2488
    %v2656 = vunpack.c.l.b16 %v2489
    %v2657 = vunpack.c.l.b16 %v2490
    %v2658 = vunpack.c.l.b16 %v2491
    %v2659 = vunpack.c.l.b16 %v2492
    %v2660 = vunpack.c.l.b16 %v2493
    %v2661 = vunpack.c.l.b16 %v2494
    %v2662 = vunpack.c.l.b16 %v2495
    %v2663 = vunpack.c.l.b16 %v2496
    %v2664 = vunpack.c.l.b16 %v2497
    %v2665 = vunpack.c.l.b16 %v2498
    %v2666 = vunpack.c.l.b16 %v2499
    %v2667 = vunpack.c.l.b16 %v2500
    %v2668 = vunpack.c.l.b16 %v2501
    %v2669 = vunpack.c.l.b16 %v2502
    %v2670 = vunpack.c.l.b16 %v2503
    %v2671 = vunpack.c.l.b16 %v2504
    %v2672 = vunpack.c.l.b16 %v2505
    %v2673 = vunpack.c.l.b16 %v2506
    %v2674 = vunpack.c.l.b16 %v2507
    %v2675 = vunpack.c.l.b16 %v2508
    %v2676 = vunpack.c.l.b16 %v2509
    %v2677 = vunpack.c.l.b16 %v2510
    %v2678 = vunpack.c.l.b16 %v2511
    %v2679 = vunpack.c.l.b16 %v2512
    %v2680 = vunpack.c.l.b16 %v2513
    %v2681 = vunpack.c.l.b16 %v2514
    %v2682 = vunpack.c.l.b16 %v2515
    %v2683 = vunpack.c.l.b16 %v2516
    %v2684 = vunpack.c.l.b16 %v2517
    %v2685 = vunpack.c.l.b16 %v2518
    %v2686 = vunpack.c.l.b16 %v2519
    %v2687 = vunpack.c.l.b16 %v2520
    %v2688 = vunpack.c.l.b16 %v2521
    %v2689 = vunpack.c.l.b16 %v2522
    %v2690 = vunpack.c.l.b16 %v2523
    %v2691 = vunpack.c.l.b16 %v2524
    %v2692 = vunpack.c.l.b16 %v2525
    %v2693 = vunpack.c.l.b16 %v2526
    %v2694 = vunpack.c.l.b16 %v2527
    %v2695 = vunpack.c.l.b16 %v2528
    %v2696 = vunpack.c.l.b16 %v2529
    %v2697 = vunpack.c.l.b16 %v2530
    %v2698 = vunpack.c.l.b16 %v2531
    %v2699 = vunpack.c.l.b16 %v2532
    %v2700 = vunpack.c.l.b16 %v2533
    %v2701 = vunpack.c.l.b16 %v2534
    %v2702 = vunpack.c.l.b16 %v2535
    %v2703 = vunpack.c.l.b16 %v2536
    %v2704 = vunpack.c.l.b16 %v2537
    %v2705 = vunpack.c.l.b16 %v2538
    %v2706 = vunpack.c.l.b16 %v2539
    %v2707 = vunpack.c.l.b16 %v2540
    %v2708 = vpack.c.b16 %v2629, %v2628
    %v2709 = vpack.c.b16 %v2631, %v2630
    %v2710 = vpack.c.b16 %v2633, %v2632
    %v2711 = vpack.c.b16 %v2635, %v2634
    %v2712 = vpack.c.b16 %v2637, %v2636
    %v2713 = vpack.c.b16 %v2639, %v2638
    %v2714 = vpack.c.b16 %v2641, %v2640
    %v2715 = vpack.c.b16 %v2643, %v2642
    %v2716 = vpack.c.b16 %v2645, %v2644
    %v2717 = vpack.c.b16 %v2647, %v2646
    %v2718 = vpack.c.b16 %v2649, %v2648
    %v2719 = vpack.c.b16 %v2651, %v2650
    %v2720 = vpack.c.b16 %v2653, %v2652
    %v2721 = vpack.c.b16 %v2655, %v2654
    %v2722 = vpack.c.b16 %v2657, %v2656
    %v2723 = vpack.c.b16 %v2659, %v2658
    %v2724 = vpack.c.b16 %v2661, %v2660
    %v2725 = vpack.c.b16 %v2663, %v2662
    %v2726 = vpack.c.b16 %v2665, %v2664
    %v2727 = vpack.c.b16 %v2667, %v2666
    %v2728 = vpack.c.b16 %v2669, %v2668
    %v2729 = vpack.c.b16 %v2671, %v2670
    %v2730 = vpack.c.b16 %v2673, %v2672
    %v2731 = vpack.c.b16 %v2675, %v2674
    %v2732 = vpack.c.b16 %v2677, %v2676
    %v2733 = vpack.c.b16 %v2679, %v2678
    %v2734 = vpack.c.b16 %v2681, %v2680
    %v2735 = vpack.c.b16 %v2683, %v2682
    %v2736 = vpack.c.b16 %v2685, %v2684
    %v2737 = vpack.c.b16 %v2687, %v2686
    %v2738 = vpack.c.b16 %v2689, %v2688
    %v2739 = vpack.c.b16 %v2691, %v2690
    %v2740 = vpack.c.b16 %v2693, %v2692
    %v2741 = vpack.c.b16 %v2695, %v2694
    %v2742 = vpack.c.b16 %v2697, %v2696
    %v2743 = vpack.c.b16 %v2699, %v2698
    %v2744 = vpack.c.b16 %v2701, %v2700
    %v2745 = vpack.c.b16 %v2703, %v2702
    %v2746 = vpack.c.b16 %v2705, %v2704
    %v2747 = vpack.c.b16 %v2707, %v2706
    %2788 = vmatprep.subr.bf16.mxu0 0
    %2789 = vmatpush1.bf16.msra.mxu0 %v2708
    %2790 = vmatprep.subr.bf16.mxu0 0
    %2791 = vmatpush1.bf16.msra.mxu0 %v2709
    %2792 = vmatprep.subr.bf16.mxu0 0
    %2793 = vmatpush1.bf16.msra.mxu0 %v2710
    %2794 = vmatprep.subr.bf16.mxu0 0
    %2795 = vmatpush1.bf16.msra.mxu0 %v2711
    %2796 = vmatprep.subr.bf16.mxu0 0
    %2797 = vmatpush1.bf16.msra.mxu0 %v2712
    %2798 = vmatprep.subr.bf16.mxu0 0
    %2799 = vmatpush1.bf16.msra.mxu0 %v2713
    %2800 = vmatprep.subr.bf16.mxu0 0
    %2801 = vmatpush1.bf16.msra.mxu0 %v2714
    %2802 = vmatprep.subr.bf16.mxu0 0
    %2803 = vmatpush1.bf16.msra.mxu0 %v2715
    %2804 = vmatprep.subr.bf16.mxu0 0
    %2805 = vmatpush1.bf16.msra.mxu0 %v2716
    %2806 = vmatprep.subr.bf16.mxu0 0
    %2807 = vmatpush1.bf16.msra.mxu0 %v2717
    %2808 = vmatprep.subr.bf16.mxu0 0
    %2809 = vmatpush1.bf16.msra.mxu0 %v2718
    %2810 = vmatprep.subr.bf16.mxu0 0
    %2811 = vmatpush1.bf16.msra.mxu0 %v2719
    %2812 = vmatprep.subr.bf16.mxu0 0
    %2813 = vmatpush1.bf16.msra.mxu0 %v2720
    %2814 = vmatprep.subr.bf16.mxu0 0
    %2815 = vmatpush1.bf16.msra.mxu0 %v2721
    %2816 = vmatprep.subr.bf16.mxu0 0
    %2817 = vmatpush1.bf16.msra.mxu0 %v2722
    %2818 = vmatprep.subr.bf16.mxu0 0
    %2819 = vmatpush1.bf16.msra.mxu0 %v2723
    %2820 = vmatprep.mubr.bf16.mxu0 %v2457
    %2821 = vmatmul.mubr.bf16.gmra.mrb[0].mxu0 %v2456
    %v2822 = vpop.f32.mrb[0].mxu0
    %v2823 = vadd.f32 %v2546, %v2822
    %v2824 = vpop.f32.mrb[0].mxu0
    %v2825 = vpop.f32.mrb[0].mxu0
    %v2826 = vpop.f32.mrb[0].mxu0
    %2827 = vdwg.mxu0
    %2828 = vmatprep.subr.bf16.mxu0 0
    %2829 = vmatpush1.bf16.msra.mxu0 %v2724
    %2830 = vmatprep.subr.bf16.mxu0 0
    %2831 = vmatpush1.bf16.msra.mxu0 %v2725
    %2832 = vmatprep.subr.bf16.mxu0 0
    %2833 = vmatpush1.bf16.msra.mxu0 %v2726
    %2834 = vmatprep.subr.bf16.mxu0 0
    %2835 = vmatpush1.bf16.msra.mxu0 %v2727
    %2836 = vmatprep.subr.bf16.mxu0 0
    %2837 = vmatpush1.bf16.msra.mxu0 %v2728
    %2838 = vmatprep.subr.bf16.mxu0 0
    %2839 = vmatpush1.bf16.msra.mxu0 %v2729
    %2840 = vmatprep.subr.bf16.mxu0 0
    %2841 = vmatpush1.bf16.msra.mxu0 %v2730
    %2842 = vmatprep.subr.bf16.mxu0 0
    %2843 = vmatpush1.bf16.msra.mxu0 %v2731
    %2844 = vmatprep.subr.bf16.mxu0 0
    %2845 = vmatpush1.bf16.msra.mxu0 %v2732
    %2846 = vmatprep.subr.bf16.mxu0 0
    %2847 = vmatpush1.bf16.msra.mxu0 %v2733
    %2848 = vmatprep.subr.bf16.mxu0 0
    %2849 = vmatpush1.bf16.msra.mxu0 %v2734
    %2850 = vmatprep.subr.bf16.mxu0 0
    %2851 = vmatpush1.bf16.msra.mxu0 %v2735
    %2852 = vmatprep.subr.bf16.mxu0 0
    %2853 = vmatpush1.bf16.msra.mxu0 %v2736
    %2854 = vmatprep.subr.bf16.mxu0 0
    %2855 = vmatpush1.bf16.msra.mxu0 %v2737
    %2856 = vmatprep.subr.bf16.mxu0 0
    %2857 = vmatpush1.bf16.msra.mxu0 %v2738
    %2858 = vmatprep.subr.bf16.mxu0 0
    %2859 = vmatpush1.bf16.msra.mxu0 %v2739
    %2860 = vmatprep.mubr.bf16.mxu0 %v2459
    %2861 = vmatmul.mubr.bf16.gmra.mrb[0].mxu0 %v2458
    %v2862 = vpop.f32.mrb[0].mxu0
    %v2863 = vadd.f32 %v2823, %v2862
    %v2864 = vpop.f32.mrb[0].mxu0
    %v2865 = vpop.f32.mrb[0].mxu0
    %v2866 = vpop.f32.mrb[0].mxu0
    %2867 = vdwg.mxu0
    %2868 = vmatprep.subr.bf16.mxu0 0
    %2869 = vmatpush1.bf16.msra.mxu0 %v2740
    %2870 = vmatprep.subr.bf16.mxu0 0
    %2871 = vmatpush1.bf16.msra.mxu0 %v2741
    %2872 = vmatprep.subr.bf16.mxu0 0
    %2873 = vmatpush1.bf16.msra.mxu0 %v2742
    %2874 = vmatprep.subr.bf16.mxu0 0
    %2875 = vmatpush1.bf16.msra.mxu0 %v2743
    %2876 = vmatprep.subr.bf16.mxu0 0
    %2877 = vmatpush1.bf16.msra.mxu0 %v2744
    %2878 = vmatprep.subr.bf16.mxu0 0
    %2879 = vmatpush1.bf16.msra.mxu0 %v2745
    %2880 = vmatprep.subr.bf16.mxu0 0
    %2881 = vmatpush1.bf16.msra.mxu0 %v2746
    %2882 = vmatprep.subr.bf16.mxu0 0
    %2883 = vmatpush1.bf16.msra.mxu0 %v2747
    %2884 = vmatprep.subr.bf16.mxu0 0
    %2885 = vmatpush1.bf16.msra.mxu0 0
    %2886 = vmatprep.subr.bf16.mxu0 0
    %2887 = vmatpush1.bf16.msra.mxu0 0
    %2888 = vmatprep.subr.bf16.mxu0 0
    %2889 = vmatpush1.bf16.msra.mxu0 0
    %2890 = vmatprep.subr.bf16.mxu0 0
    %2891 = vmatpush1.bf16.msra.mxu0 0
    %2892 = vmatprep.subr.bf16.mxu0 0
    %2893 = vmatpush1.bf16.msra.mxu0 0
    %2894 = vmatprep.subr.bf16.mxu0 0
    %2895 = vmatpush1.bf16.msra.mxu0 0
    %2896 = vmatprep.subr.bf16.mxu0 0
    %2897 = vmatpush1.bf16.msra.mxu0 0
    %2898 = vmatprep.subr.bf16.mxu0 0
    %2899 = vmatpush1.bf16.msra.mxu0 0
    %2900 = vmatprep.mubr.bf16.mxu0 0
    %2901 = vmatmul.mubr.bf16.gmra.mrb[0].mxu0 %v2460
    %v2902 = vpop.f32.mrb[0].mxu0
    %v2903 = vadd.f32 %v2863, %v2902
    %v2904 = vpop.f32.mrb[0].mxu0
    %v2905 = vpop.f32.mrb[0].mxu0
    %v2906 = vpop.f32.mrb[0].mxu0
    %2907 = vdwg.mxu0
    %v2908 = vmax.f32 %v2903, 0.0
    %v2909 = vpack.c.bf16 %v2908, %v2908
    %v2910 = vld [vmem:[#allocation11] sm:$0xf]
    %v2911 = vld [vmem:[#allocation11 + $0x4] sm:$0xf]
    %v2912 = vld [vmem:[#allocation11 + $0x8] sm:$0xf]
    %v2913 = vld [vmem:[#allocation11 + $0xc] sm:$0xf]
    %v2914 = vld [vmem:[#allocation11 + $0x10] sm:$0xf]
    %v2915 = vld [vmem:[#allocation11 + $0x14] sm:$0xf]
    %v2916 = vld [vmem:[#allocation11 + $0x18] sm:$0xf]
    %v2917 = vld [vmem:[#allocation11 + $0x1c] sm:$0xf]
    %v2918 = vld [vmem:[#allocation11 + $0x20] sm:$0xf]
    %v2919 = vld [vmem:[#allocation11 + $0x24] sm:$0xf]
    %v2920 = vld [vmem:[#allocation11 + $0x28] sm:$0xf]
    %v2921 = vld [vmem:[#allocation11 + $0x2c] sm:$0xf]
    %v2922 = vld [vmem:[#allocation11 + $0x30] sm:$0xf]
    %v2923 = vld [vmem:[#allocation11 + $0x34] sm:$0xf]
    %v2924 = vld [vmem:[#allocation11 + $0x38] sm:$0xf]
    %v2925 = vld [vmem:[#allocation11 + $0x3c] sm:$0xf]
    %v2926 = vld [vmem:[#allocation13] sm:$0x1]
    %v2928 = vlaneseq
    %v2929 = vshrl.u32 %v2928, 7
    %v2930 = vsub.s32 0, %v2929
    %v2931 = vrot.slane %v2926, %v2930
    %v2949 = vunpack.c.l.b16 %v2910
    %v2950 = vunpack.c.l.b16 %v2911
    %v2951 = vunpack.c.l.b16 %v2912
    %v2952 = vunpack.c.l.b16 %v2913
    %v2953 = vunpack.c.l.b16 %v2914
    %v2954 = vunpack.c.l.b16 %v2915
    %v2955 = vunpack.c.l.b16 %v2916
    %v2956 = vunpack.c.l.b16 %v2917
    %v2957 = vunpack.c.l.b16 %v2918
    %v2958 = vunpack.c.l.b16 %v2919
    %v2959 = vunpack.c.l.b16 %v2920
    %v2960 = vunpack.c.l.b16 %v2921
    %v2961 = vunpack.c.l.b16 %v2922
    %v2962 = vunpack.c.l.b16 %v2923
    %v2963 = vunpack.c.l.b16 %v2924
    %v2964 = vunpack.c.l.b16 %v2925
    %v2965 = vpack.c.b16 %v2950, %v2949
    %v2966 = vpack.c.b16 %v2952, %v2951
    %v2967 = vpack.c.b16 %v2954, %v2953
    %v2968 = vpack.c.b16 %v2956, %v2955
    %v2969 = vpack.c.b16 %v2958, %v2957
    %v2970 = vpack.c.b16 %v2960, %v2959
    %v2971 = vpack.c.b16 %v2962, %v2961
    %v2972 = vpack.c.b16 %v2964, %v2963
    %2981 = vmatprep.subr.bf16.mxu0 0
    %2982 = vmatpush1.bf16.msra.mxu0 %v2965
    %2983 = vmatprep.subr.bf16.mxu0 0
    %2984 = vmatpush1.bf16.msra.mxu0 %v2966
    %2985 = vmatprep.subr.bf16.mxu0 0
    %2986 = vmatpush1.bf16.msra.mxu0 %v2967
    %2987 = vmatprep.subr.bf16.mxu0 0
    %2988 = vmatpush1.bf16.msra.mxu0 %v2968
    %2989 = vmatprep.subr.bf16.mxu0 0
    %2990 = vmatpush1.bf16.msra.mxu0 %v2969
    %2991 = vmatprep.subr.bf16.mxu0 0
    %2992 = vmatpush1.bf16.msra.mxu0 %v2970
    %2993 = vmatprep.subr.bf16.mxu0 0
    %2994 = vmatpush1.bf16.msra.mxu0 %v2971
    %2995 = vmatprep.subr.bf16.mxu0 0
    %2996 = vmatpush1.bf16.msra.mxu0 %v2972
    %2997 = vmatprep.subr.bf16.mxu0 0
    %2998 = vmatpush1.bf16.msra.mxu0 0
    %2999 = vmatprep.subr.bf16.mxu0 0
    %3000 = vmatpush1.bf16.msra.mxu0 0
    %3001 = vmatprep.subr.bf16.mxu0 0
    %3002 = vmatpush1.bf16.msra.mxu0 0
    %3003 = vmatprep.subr.bf16.mxu0 0
    %3004 = vmatpush1.bf16.msra.mxu0 0
    %3005 = vmatprep.subr.bf16.mxu0 0
    %3006 = vmatpush1.bf16.msra.mxu0 0
    %3007 = vmatprep.subr.bf16.mxu0 0
    %3008 = vmatpush1.bf16.msra.mxu0 0
    %3009 = vmatprep.subr.bf16.mxu0 0
    %3010 = vmatpush1.bf16.msra.mxu0 0
    %3011 = vmatprep.subr.bf16.mxu0 0
    %3012 = vmatpush1.bf16.msra.mxu0 0
    %3013 = vmatprep.mubr.bf16.mxu0 0
    %3014 = vmatmul.mubr.bf16.gmra.mrb[0].mxu0 %v2909
    %v3015 = vpop.f32.mrb[0].mxu0
    %v3016 = vadd.f32 %v2931, %v3015
    %v3017 = vpop.f32.mrb[0].mxu0
    %v3018 = vpop.f32.mrb[0].mxu0
    %v3019 = vpop.f32.mrb[0].mxu0
    %3020 = vdwg.mxu0
    %3021 = vst [vmem:[#allocation14] sm:$0xff] %v3016
    // Predicated region
    $region58: #{tpu_custom_call.1} parent=1 // pred_check
      _
    $region59: #{tpu_custom_call.1} parent=1 // pred_check_branch
      %3023 = sbr.rel (0) target = $region61
    $region60: #{tpu_custom_call.1} parent=1 // pred_region
      %s3025 = ssub.s32 128, 128
      %3026 = vsyncadd [#allocation4], %s3025
      %s3028 = sshll.u32 [#allocation14], 4
      %s3029 = int_to_ptr.vmem [resolvable:$true] %s3028
      %3031 = dma.vmem_to_hbm [thread:$0]  %s3029, 128, %s7, [#allocation4]
    $region61: #{tpu_custom_call.1} parent=1 // pred_fallthru
      _
    // Predicated region
    $region62: #{tpu_custom_call.1} parent=1 // pred_check
      _
    $region63: #{tpu_custom_call.1} parent=1 // pred_check_branch
      %3033 = sbr.rel (0) target = $region65
    $region64: #{tpu_custom_call.1} parent=1 // pred_region
      %3034 = dma.done [#allocation4], 128
    $region65: #{tpu_custom_call.1} parent=1 // pred_fallthru
      _
    %3035 = vsyncpa [#allocation3], 1
    %3036 = vsyncpa [#allocation6], 1
    %3037 = vsyncpa [#allocation9], 1
    %3038 = vsyncpa [#allocation12], 1
    %3039 = vsyncpa [#allocation4], 1

</llo_original>
